<compile_context>
chip_gen: v7x
topology: tpu7x:2x2x1
jax: 0.10.0
libtpu: 0.0.40
codegen_flags: <defaults>
</compile_context>

<pallas_src>
import math
import jax
import jax.numpy as jnp
from jax import lax
from jax.experimental import pallas as pl
from jax.experimental.pallas import tpu as pltpu

BATCH = 2
SEQ = 8
EMB = 32
HEADS = 4
HEAD_DIM = EMB // HEADS
LN_EPS = 1e-5
NEG_INF = -1e30   # large-negative additive mask (NaN-safe, no inf arithmetic)
VEC_ROWS = 16     # 10 rows used, padded to a sublane multiple


def _layer_norm(x, gamma, beta):
    mean = jnp.mean(x, axis=-1, keepdims=True)
    var = jnp.mean(jnp.square(x - mean), axis=-1, keepdims=True)
    return (x - mean) * lax.rsqrt(var + LN_EPS) * gamma + beta


def blocks_kernel(q_ref, k_ref, v_ref, w_ref, vec_ref, out_ref):
    S = q_ref.shape[1]
    q_in = q_ref[0]                       # (S, E) raw q input (residual path)
    k_in = k_ref[0]
    v_in = v_ref[0]

    vec = vec_ref[...]                    # (16, E) packed small vectors
    bq, bk, bv = vec[0:1, :], vec[1:2, :], vec[2:3, :]
    bo, b1, b2 = vec[3:4, :], vec[4:5, :], vec[5:6, :]
    ln1g, ln1b = vec[6:7, :], vec[7:8, :]
    ln2g, ln2b = vec[8:9, :], vec[9:10, :]

    wq = w_ref[0]                         # softmax scale already folded in
    wk = w_ref[1]
    wv = w_ref[2]
    wo = w_ref[3]
    w1 = w_ref[4]
    w2 = w_ref[5]

    # QKV in-projection (scale folded into wq/bq at pack time)
    Q = jnp.dot(q_in, wq, preferred_element_type=jnp.float32) + bq
    K = jnp.dot(k_in, wk, preferred_element_type=jnp.float32) + bk
    V = jnp.dot(v_in, wv, preferred_element_type=jnp.float32) + bv

    # in-kernel causal mask (per-batch grid -> plain (S,S) lower-triangular)
    row = lax.broadcasted_iota(jnp.int32, (S, S), 0)
    col = lax.broadcasted_iota(jnp.int32, (S, S), 1)
    mask_bias = jnp.where(col <= row, 0.0, NEG_INF).astype(jnp.float32)

    dn = (((1,), (1,)), ((), ()))         # contract last dims: q @ k^T, no XLU transpose
    heads_out = []
    for h in range(HEADS):                # static loop over heads
        lo = h * HEAD_DIM
        hi = lo + HEAD_DIM
        qh = Q[:, lo:hi]
        kh = K[:, lo:hi]
        vh = V[:, lo:hi]
        scores = lax.dot_general(qh, kh, dn, preferred_element_type=jnp.float32)
        scores = scores + mask_bias
        scores = scores - jnp.max(scores, axis=-1, keepdims=True)
        p = jnp.exp(scores)
        p = p * pl.reciprocal(jnp.sum(p, axis=-1, keepdims=True), approx=True)
        heads_out.append(jnp.dot(p, vh, preferred_element_type=jnp.float32))
    ho_all = jnp.concatenate(heads_out, axis=-1)                     # (S, E)
    # single out-projection push instead of 4 tiny K=8 dots
    attn = jnp.dot(ho_all, wo, preferred_element_type=jnp.float32) + bo
    # attn_dropout: identity (eval)

    # residual + LayerNorm 1
    x1 = _layer_norm(q_in + attn, ln1g, ln1b)

    # transformer_FFN: Linear -> ReLU -> Dropout(identity) -> Linear
    h1 = jnp.maximum(jnp.dot(x1, w1, preferred_element_type=jnp.float32) + b1, 0.0)
    ffn = jnp.dot(h1, w2, preferred_element_type=jnp.float32) + b2
    # FFN_dropout: identity (eval)

    # residual + LayerNorm 2
    out_ref[0] = _layer_norm(x1 + ffn, ln2g, ln2b)


def pack_params(params):
    """One-time weight packing (call once, OFF the per-step hot path).

    Folds the 1/sqrt(head_dim) softmax scale into wq/bq and stacks all square
    weights into one (6, E, E) operand and all (1, E) vectors into one
    (VEC_ROWS, E) slab.
    """
    (wq, wk, wv, bq, bk, bv, wo, bo,
     ln1g, ln1b, w1, b1, w2, b2, ln2g, ln2b) = params
    scale = 1.0 / math.sqrt(HEAD_DIM)
    w_stack = jnp.stack([wq * scale, wk, wv, wo, w1, w2], axis=0)     # (6, E, E)
    vec_pack = jnp.concatenate(
        [bq * scale, bk, bv, bo, b1, b2, ln1g, ln1b, ln2g, ln2b,
         jnp.zeros((VEC_ROWS - 10, EMB), jnp.float32)], axis=0)       # (16, E)
    return w_stack, vec_pack


@jax.jit
def blocks_forward(q, k, v, w_stack, vec_pack):
    B, S, E = q.shape
    # Per-batch activation blocks; weight operands get constant index_maps so
    # Pallas keeps them resident (no re-DMA across grid steps).  Blocked
    # BlockSpecs place operands in VMEM by default.
    act_spec = pl.BlockSpec((1, S, E), lambda b: (b, 0, 0))
    return pl.pallas_call(
        blocks_kernel,
        out_shape=jax.ShapeDtypeStruct((B, S, E), jnp.float32),
        grid_spec=pltpu.PrefetchScalarGridSpec(
            num_scalar_prefetch=0,
            grid=(B,),
            in_specs=[
                act_spec,                                             # q
                act_spec,                                             # k
                act_spec,                                             # v
                pl.BlockSpec((6, E, E), lambda b: (0, 0, 0)),         # weight stack
                pl.BlockSpec((VEC_ROWS, E), lambda b: (0, 0)),        # vector slab
            ],
            out_specs=act_spec,
        ),
        compiler_params=pltpu.CompilerParams(
            dimension_semantics=("parallel",)),
    )(q, k, v, w_stack, vec_pack)


def reference(q, k, v, params):
    (wq, wk, wv, bq, bk, bv, wo, bo,
     ln1g, ln1b, w1, b1, w2, b2, ln2g, ln2b) = params

    def ln(x, g, b):
        m = x.mean(-1, keepdims=True)
        var = ((x - m) ** 2).mean(-1, keepdims=True)
        return (x - m) / jnp.sqrt(var + LN_EPS) * g + b

    B, S, E = q.shape
    Q = q @ wq + bq
    K = k @ wk + bk
    V = v @ wv + bv
    Qh = Q.reshape(B, S, HEADS, HEAD_DIM).transpose(0, 2, 1, 3)
    Kh = K.reshape(B, S, HEADS, HEAD_DIM).transpose(0, 2, 1, 3)
    Vh = V.reshape(B, S, HEADS, HEAD_DIM).transpose(0, 2, 1, 3)
    scores = jnp.einsum('bhqd,bhkd->bhqk', Qh, Kh) / math.sqrt(HEAD_DIM)
    mask = jnp.triu(jnp.ones((S, S), bool), 1)
    scores = jnp.where(mask, -jnp.inf, scores)
    p = jax.nn.softmax(scores, axis=-1)
    attn = jnp.einsum('bhqk,bhkd->bhqd', p, Vh).transpose(0, 2, 1, 3).reshape(B, S, E)
    attn = attn @ wo + bo
    x = ln(q + attn, ln1g, ln1b)
    ffn = jax.nn.relu(x @ w1 + b1) @ w2 + b2
    return ln(x + ffn, ln2g, ln2b)


def make_params(key):
    ks = jax.random.split(key, 12)

    def w(k, shape):
        return jax.random.normal(k, shape, jnp.float32) * 0.1

    wq = w(ks[0], (EMB, EMB)); wk = w(ks[1], (EMB, EMB)); wv = w(ks[2], (EMB, EMB))
    bq = w(ks[3], (1, EMB));   bk = w(ks[4], (1, EMB));   bv = w(ks[5], (1, EMB))
    wo = w(ks[6], (EMB, EMB)); bo = w(ks[7], (1, EMB))
    ln1g = jnp.ones((1, EMB), jnp.float32); ln1b = jnp.zeros((1, EMB), jnp.float32)
    w1 = w(ks[8], (EMB, EMB)); b1 = w(ks[9], (1, EMB))
    w2 = w(ks[10], (EMB, EMB)); b2 = w(ks[11], (1, EMB))
    ln2g = jnp.ones((1, EMB), jnp.float32); ln2b = jnp.zeros((1, EMB), jnp.float32)
    return (wq, wk, wv, bq, bk, bv, wo, bo,
            ln1g, ln1b, w1, b1, w2, b2, ln2g, ln2b)


if __name__ == "__main__":
    key = jax.random.PRNGKey(0)
    kq, kk, kv, kp = jax.random.split(key, 4)
    q = jax.random.normal(kq, (BATCH, SEQ, EMB), jnp.float32)
    k = jax.random.normal(kk, (BATCH, SEQ, EMB), jnp.float32)
    v = jax.random.normal(kv, (BATCH, SEQ, EMB), jnp.float32)
    params = make_params(kp)

    # one-time packing, off the per-call hot path
    w_stack, vec_pack = pack_params(params)
    w_stack = jax.block_until_ready(w_stack)
    vec_pack = jax.block_until_ready(vec_pack)

    out = blocks_forward(q, k, v, w_stack, vec_pack)
    out = jax.block_until_ready(out)

    ref = reference(q, k, v, params)
    assert out.shape == (BATCH, SEQ, EMB)
    # tolerance loosened slightly vs. exact-math version because the softmax
    # denominator uses the EUP approx reciprocal (pl.reciprocal(approx=True)).
    assert jnp.allclose(out, ref, atol=2e-3, rtol=2e-3), \
        f"max abs diff {jnp.max(jnp.abs(out - ref))}"
    print("KERNEL_OK")
</pallas_src>

<mosaic_0001>
module attributes {stable_mosaic.version = 11 : i64} {
  func.func @blocks_kernel(%arg0: i32, %arg1: memref<1x8x32xf32, #tpu.memory_space<vmem>>, %arg2: memref<1x8x32xf32, #tpu.memory_space<vmem>>, %arg3: memref<1x8x32xf32, #tpu.memory_space<vmem>>, %arg4: memref<6x32x32xf32, #tpu.memory_space<vmem>>, %arg5: memref<16x32xf32, #tpu.memory_space<vmem>>, %arg6: memref<1x8x32xf32, #tpu.memory_space<vmem>>) attributes {dimension_semantics = [#tpu.dimension_semantics<parallel>], iteration_bounds = array<i64: 2>, scalar_prefetch = 0 : i64, scratch_operands = 0 : i64, tpu.core_type = #tpu.core_type<tc>, window_params = [{transform_indices = @transform_0, window_bounds = array<i64: 1, 8, 32>}, {transform_indices = @transform_1, window_bounds = array<i64: 1, 8, 32>}, {transform_indices = @transform_2, window_bounds = array<i64: 1, 8, 32>}, {pipeline_mode = #tpu.pipeline_mode<synchronous>, transform_indices = @transform_3, window_bounds = array<i64: 6, 32, 32>}, {pipeline_mode = #tpu.pipeline_mode<synchronous>, transform_indices = @transform_4, window_bounds = array<i64: 16, 32>}, {transform_indices = @transform_5, window_bounds = array<i64: 1, 8, 32>}]} {
    %c0 = arith.constant 0 : index
    %c0_0 = arith.constant 0 : index
    %c0_1 = arith.constant 0 : index
    %0 = vector.load %arg1[%c0, %c0_0, %c0_1] : memref<1x8x32xf32, #tpu.memory_space<vmem>>, vector<1x8x32xf32>
    %1 = vector.shape_cast %0 : vector<1x8x32xf32> to vector<8x32xf32>
    %c0_2 = arith.constant 0 : index
    %c0_3 = arith.constant 0 : index
    %c0_4 = arith.constant 0 : index
    %2 = vector.load %arg2[%c0_2, %c0_3, %c0_4] : memref<1x8x32xf32, #tpu.memory_space<vmem>>, vector<1x8x32xf32>
    %3 = vector.shape_cast %2 : vector<1x8x32xf32> to vector<8x32xf32>
    %c0_5 = arith.constant 0 : index
    %c0_6 = arith.constant 0 : index
    %c0_7 = arith.constant 0 : index
    %4 = vector.load %arg3[%c0_5, %c0_6, %c0_7] : memref<1x8x32xf32, #tpu.memory_space<vmem>>, vector<1x8x32xf32>
    %5 = vector.shape_cast %4 : vector<1x8x32xf32> to vector<8x32xf32>
    %c0_8 = arith.constant 0 : index
    %c0_9 = arith.constant 0 : index
    %6 = vector.load %arg5[%c0_8, %c0_9] : memref<16x32xf32, #tpu.memory_space<vmem>>, vector<16x32xf32>
    %7 = vector.extract_strided_slice %6 {offsets = [0, 0], sizes = [1, 32], strides = [1, 1]} : vector<16x32xf32> to vector<1x32xf32>
    %8 = vector.extract_strided_slice %6 {offsets = [1, 0], sizes = [1, 32], strides = [1, 1]} : vector<16x32xf32> to vector<1x32xf32>
    %9 = vector.extract_strided_slice %6 {offsets = [2, 0], sizes = [1, 32], strides = [1, 1]} : vector<16x32xf32> to vector<1x32xf32>
    %10 = vector.extract_strided_slice %6 {offsets = [3, 0], sizes = [1, 32], strides = [1, 1]} : vector<16x32xf32> to vector<1x32xf32>
    %11 = vector.extract_strided_slice %6 {offsets = [4, 0], sizes = [1, 32], strides = [1, 1]} : vector<16x32xf32> to vector<1x32xf32>
    %12 = vector.extract_strided_slice %6 {offsets = [5, 0], sizes = [1, 32], strides = [1, 1]} : vector<16x32xf32> to vector<1x32xf32>
    %13 = vector.extract_strided_slice %6 {offsets = [6, 0], sizes = [1, 32], strides = [1, 1]} : vector<16x32xf32> to vector<1x32xf32>
    %14 = vector.extract_strided_slice %6 {offsets = [7, 0], sizes = [1, 32], strides = [1, 1]} : vector<16x32xf32> to vector<1x32xf32>
    %15 = vector.extract_strided_slice %6 {offsets = [8, 0], sizes = [1, 32], strides = [1, 1]} : vector<16x32xf32> to vector<1x32xf32>
    %16 = vector.extract_strided_slice %6 {offsets = [9, 0], sizes = [1, 32], strides = [1, 1]} : vector<16x32xf32> to vector<1x32xf32>
    %c0_10 = arith.constant 0 : index
    %c0_11 = arith.constant 0 : index
    %c0_12 = arith.constant 0 : index
    %17 = vector.load %arg4[%c0_10, %c0_11, %c0_12] : memref<6x32x32xf32, #tpu.memory_space<vmem>>, vector<1x32x32xf32>
    %18 = vector.shape_cast %17 : vector<1x32x32xf32> to vector<32x32xf32>
    %c1 = arith.constant 1 : index
    %c0_13 = arith.constant 0 : index
    %c0_14 = arith.constant 0 : index
    %19 = vector.load %arg4[%c1, %c0_13, %c0_14] : memref<6x32x32xf32, #tpu.memory_space<vmem>>, vector<1x32x32xf32>
    %20 = vector.shape_cast %19 : vector<1x32x32xf32> to vector<32x32xf32>
    %c2 = arith.constant 2 : index
    %c0_15 = arith.constant 0 : index
    %c0_16 = arith.constant 0 : index
    %21 = vector.load %arg4[%c2, %c0_15, %c0_16] : memref<6x32x32xf32, #tpu.memory_space<vmem>>, vector<1x32x32xf32>
    %22 = vector.shape_cast %21 : vector<1x32x32xf32> to vector<32x32xf32>
    %c3 = arith.constant 3 : index
    %c0_17 = arith.constant 0 : index
    %c0_18 = arith.constant 0 : index
    %23 = vector.load %arg4[%c3, %c0_17, %c0_18] : memref<6x32x32xf32, #tpu.memory_space<vmem>>, vector<1x32x32xf32>
    %24 = vector.shape_cast %23 : vector<1x32x32xf32> to vector<32x32xf32>
    %c4 = arith.constant 4 : index
    %c0_19 = arith.constant 0 : index
    %c0_20 = arith.constant 0 : index
    %25 = vector.load %arg4[%c4, %c0_19, %c0_20] : memref<6x32x32xf32, #tpu.memory_space<vmem>>, vector<1x32x32xf32>
    %26 = vector.shape_cast %25 : vector<1x32x32xf32> to vector<32x32xf32>
    %c5 = arith.constant 5 : index
    %c0_21 = arith.constant 0 : index
    %c0_22 = arith.constant 0 : index
    %27 = vector.load %arg4[%c5, %c0_21, %c0_22] : memref<6x32x32xf32, #tpu.memory_space<vmem>>, vector<1x32x32xf32>
    %28 = vector.shape_cast %27 : vector<1x32x32xf32> to vector<32x32xf32>
    %cst = arith.constant dense<0.000000e+00> : vector<8x32xf32>
    %29 = tpu.matmul %1, %18, %cst {dimension_numbers = #tpu.dot_dimension_numbers<[1], [0], [0], [1], [0, 0, 1, 1], [], []>} : vector<8x32xf32>, vector<32x32xf32>, vector<8x32xf32> -> vector<8x32xf32>
    %30 = vector.broadcast %7 : vector<1x32xf32> to vector<8x32xf32>
    %31 = arith.addf %29, %30 : vector<8x32xf32>
    %cst_23 = arith.constant dense<0.000000e+00> : vector<8x32xf32>
    %32 = tpu.matmul %3, %20, %cst_23 {dimension_numbers = #tpu.dot_dimension_numbers<[1], [0], [0], [1], [0, 0, 1, 1], [], []>} : vector<8x32xf32>, vector<32x32xf32>, vector<8x32xf32> -> vector<8x32xf32>
    %33 = vector.broadcast %8 : vector<1x32xf32> to vector<8x32xf32>
    %34 = arith.addf %32, %33 : vector<8x32xf32>
    %cst_24 = arith.constant dense<0.000000e+00> : vector<8x32xf32>
    %35 = tpu.matmul %5, %22, %cst_24 {dimension_numbers = #tpu.dot_dimension_numbers<[1], [0], [0], [1], [0, 0, 1, 1], [], []>} : vector<8x32xf32>, vector<32x32xf32>, vector<8x32xf32> -> vector<8x32xf32>
    %36 = vector.broadcast %9 : vector<1x32xf32> to vector<8x32xf32>
    %37 = arith.addf %35, %36 : vector<8x32xf32>
    %38 = tpu.iota {dimensions = array<i32: 0>} : vector<8x8xi32>
    %39 = tpu.iota {dimensions = array<i32: 1>} : vector<8x8xi32>
    %40 = arith.cmpi sle, %39, %38 : vector<8x8xi32>
    %cst_25 = arith.constant 0.000000e+00 : f32
    %cst_26 = arith.constant -1.000000e+30 : f32
    %41 = vector.broadcast %cst_25 : f32 to vector<8x8xf32>
    %42 = vector.broadcast %cst_26 : f32 to vector<8x8xf32>
    %43 = arith.select %40, %41, %42 : vector<8x8xi1>, vector<8x8xf32>
    %44 = vector.extract_strided_slice %31 {offsets = [0, 0], sizes = [8, 8], strides = [1, 1]} : vector<8x32xf32> to vector<8x8xf32>
    %45 = vector.extract_strided_slice %34 {offsets = [0, 0], sizes = [8, 8], strides = [1, 1]} : vector<8x32xf32> to vector<8x8xf32>
    %46 = vector.extract_strided_slice %37 {offsets = [0, 0], sizes = [8, 8], strides = [1, 1]} : vector<8x32xf32> to vector<8x8xf32>
    %cst_27 = arith.constant dense<0.000000e+00> : vector<8x8xf32>
    %47 = tpu.matmul %44, %45, %cst_27 {dimension_numbers = #tpu.dot_dimension_numbers<[1], [1], [0], [0], [0, 0, 1, 0], [], []>} : vector<8x8xf32>, vector<8x8xf32>, vector<8x8xf32> -> vector<8x8xf32>
    %48 = arith.addf %47, %43 : vector<8x8xf32>
    %cst_28 = arith.constant dense<0xFF800000> : vector<8xf32>
    %49 = vector.multi_reduction <maximumf>, %48, %cst_28 [1] : vector<8x8xf32> to vector<8xf32>
    %50 = vector.shape_cast %49 : vector<8xf32> to vector<8x1xf32>
    %51 = vector.broadcast %50 : vector<8x1xf32> to vector<8x8xf32>
    %52 = arith.subf %48, %51 : vector<8x8xf32>
    %53 = math.exp %52 : vector<8x8xf32>
    %cst_29 = arith.constant dense<0.000000e+00> : vector<8xf32>
    %54 = vector.multi_reduction <add>, %53, %cst_29 [1] : vector<8x8xf32> to vector<8xf32>
    %55 = vector.shape_cast %54 : vector<8xf32> to vector<8x1xf32>
    %56 = tpu.reciprocal %55 {approx = true} : vector<8x1xf32> -> vector<8x1xf32>
    %57 = vector.broadcast %56 : vector<8x1xf32> to vector<8x8xf32>
    %58 = arith.mulf %53, %57 : vector<8x8xf32>
    %cst_30 = arith.constant dense<0.000000e+00> : vector<8x8xf32>
    %59 = tpu.matmul %58, %46, %cst_30 {dimension_numbers = #tpu.dot_dimension_numbers<[1], [0], [0], [1], [0, 0, 1, 1], [], []>} : vector<8x8xf32>, vector<8x8xf32>, vector<8x8xf32> -> vector<8x8xf32>
    %60 = vector.extract_strided_slice %31 {offsets = [0, 8], sizes = [8, 8], strides = [1, 1]} : vector<8x32xf32> to vector<8x8xf32>
    %61 = vector.extract_strided_slice %34 {offsets = [0, 8], sizes = [8, 8], strides = [1, 1]} : vector<8x32xf32> to vector<8x8xf32>
    %62 = vector.extract_strided_slice %37 {offsets = [0, 8], sizes = [8, 8], strides = [1, 1]} : vector<8x32xf32> to vector<8x8xf32>
    %cst_31 = arith.constant dense<0.000000e+00> : vector<8x8xf32>
    %63 = tpu.matmul %60, %61, %cst_31 {dimension_numbers = #tpu.dot_dimension_numbers<[1], [1], [0], [0], [0, 0, 1, 0], [], []>} : vector<8x8xf32>, vector<8x8xf32>, vector<8x8xf32> -> vector<8x8xf32>
    %64 = arith.addf %63, %43 : vector<8x8xf32>
    %cst_32 = arith.constant dense<0xFF800000> : vector<8xf32>
    %65 = vector.multi_reduction <maximumf>, %64, %cst_32 [1] : vector<8x8xf32> to vector<8xf32>
    %66 = vector.shape_cast %65 : vector<8xf32> to vector<8x1xf32>
    %67 = vector.broadcast %66 : vector<8x1xf32> to vector<8x8xf32>
    %68 = arith.subf %64, %67 : vector<8x8xf32>
    %69 = math.exp %68 : vector<8x8xf32>
    %cst_33 = arith.constant dense<0.000000e+00> : vector<8xf32>
    %70 = vector.multi_reduction <add>, %69, %cst_33 [1] : vector<8x8xf32> to vector<8xf32>
    %71 = vector.shape_cast %70 : vector<8xf32> to vector<8x1xf32>
    %72 = tpu.reciprocal %71 {approx = true} : vector<8x1xf32> -> vector<8x1xf32>
    %73 = vector.broadcast %72 : vector<8x1xf32> to vector<8x8xf32>
    %74 = arith.mulf %69, %73 : vector<8x8xf32>
    %cst_34 = arith.constant dense<0.000000e+00> : vector<8x8xf32>
    %75 = tpu.matmul %74, %62, %cst_34 {dimension_numbers = #tpu.dot_dimension_numbers<[1], [0], [0], [1], [0, 0, 1, 1], [], []>} : vector<8x8xf32>, vector<8x8xf32>, vector<8x8xf32> -> vector<8x8xf32>
    %76 = vector.extract_strided_slice %31 {offsets = [0, 16], sizes = [8, 8], strides = [1, 1]} : vector<8x32xf32> to vector<8x8xf32>
    %77 = vector.extract_strided_slice %34 {offsets = [0, 16], sizes = [8, 8], strides = [1, 1]} : vector<8x32xf32> to vector<8x8xf32>
    %78 = vector.extract_strided_slice %37 {offsets = [0, 16], sizes = [8, 8], strides = [1, 1]} : vector<8x32xf32> to vector<8x8xf32>
    %cst_35 = arith.constant dense<0.000000e+00> : vector<8x8xf32>
    %79 = tpu.matmul %76, %77, %cst_35 {dimension_numbers = #tpu.dot_dimension_numbers<[1], [1], [0], [0], [0, 0, 1, 0], [], []>} : vector<8x8xf32>, vector<8x8xf32>, vector<8x8xf32> -> vector<8x8xf32>
    %80 = arith.addf %79, %43 : vector<8x8xf32>
    %cst_36 = arith.constant dense<0xFF800000> : vector<8xf32>
    %81 = vector.multi_reduction <maximumf>, %80, %cst_36 [1] : vector<8x8xf32> to vector<8xf32>
    %82 = vector.shape_cast %81 : vector<8xf32> to vector<8x1xf32>
    %83 = vector.broadcast %82 : vector<8x1xf32> to vector<8x8xf32>
    %84 = arith.subf %80, %83 : vector<8x8xf32>
    %85 = math.exp %84 : vector<8x8xf32>
    %cst_37 = arith.constant dense<0.000000e+00> : vector<8xf32>
    %86 = vector.multi_reduction <add>, %85, %cst_37 [1] : vector<8x8xf32> to vector<8xf32>
    %87 = vector.shape_cast %86 : vector<8xf32> to vector<8x1xf32>
    %88 = tpu.reciprocal %87 {approx = true} : vector<8x1xf32> -> vector<8x1xf32>
    %89 = vector.broadcast %88 : vector<8x1xf32> to vector<8x8xf32>
    %90 = arith.mulf %85, %89 : vector<8x8xf32>
    %cst_38 = arith.constant dense<0.000000e+00> : vector<8x8xf32>
    %91 = tpu.matmul %90, %78, %cst_38 {dimension_numbers = #tpu.dot_dimension_numbers<[1], [0], [0], [1], [0, 0, 1, 1], [], []>} : vector<8x8xf32>, vector<8x8xf32>, vector<8x8xf32> -> vector<8x8xf32>
    %92 = vector.extract_strided_slice %31 {offsets = [0, 24], sizes = [8, 8], strides = [1, 1]} : vector<8x32xf32> to vector<8x8xf32>
    %93 = vector.extract_strided_slice %34 {offsets = [0, 24], sizes = [8, 8], strides = [1, 1]} : vector<8x32xf32> to vector<8x8xf32>
    %94 = vector.extract_strided_slice %37 {offsets = [0, 24], sizes = [8, 8], strides = [1, 1]} : vector<8x32xf32> to vector<8x8xf32>
    %cst_39 = arith.constant dense<0.000000e+00> : vector<8x8xf32>
    %95 = tpu.matmul %92, %93, %cst_39 {dimension_numbers = #tpu.dot_dimension_numbers<[1], [1], [0], [0], [0, 0, 1, 0], [], []>} : vector<8x8xf32>, vector<8x8xf32>, vector<8x8xf32> -> vector<8x8xf32>
    %96 = arith.addf %95, %43 : vector<8x8xf32>
    %cst_40 = arith.constant dense<0xFF800000> : vector<8xf32>
    %97 = vector.multi_reduction <maximumf>, %96, %cst_40 [1] : vector<8x8xf32> to vector<8xf32>
    %98 = vector.shape_cast %97 : vector<8xf32> to vector<8x1xf32>
    %99 = vector.broadcast %98 : vector<8x1xf32> to vector<8x8xf32>
    %100 = arith.subf %96, %99 : vector<8x8xf32>
    %101 = math.exp %100 : vector<8x8xf32>
    %cst_41 = arith.constant dense<0.000000e+00> : vector<8xf32>
    %102 = vector.multi_reduction <add>, %101, %cst_41 [1] : vector<8x8xf32> to vector<8xf32>
    %103 = vector.shape_cast %102 : vector<8xf32> to vector<8x1xf32>
    %104 = tpu.reciprocal %103 {approx = true} : vector<8x1xf32> -> vector<8x1xf32>
    %105 = vector.broadcast %104 : vector<8x1xf32> to vector<8x8xf32>
    %106 = arith.mulf %101, %105 : vector<8x8xf32>
    %cst_42 = arith.constant dense<0.000000e+00> : vector<8x8xf32>
    %107 = tpu.matmul %106, %94, %cst_42 {dimension_numbers = #tpu.dot_dimension_numbers<[1], [0], [0], [1], [0, 0, 1, 1], [], []>} : vector<8x8xf32>, vector<8x8xf32>, vector<8x8xf32> -> vector<8x8xf32>
    %108 = tpu.concatenate %59, %75, %91, %107 in 1 : vector<8x8xf32>, vector<8x8xf32>, vector<8x8xf32>, vector<8x8xf32> -> vector<8x32xf32>
    %cst_43 = arith.constant dense<0.000000e+00> : vector<8x32xf32>
    %109 = tpu.matmul %108, %24, %cst_43 {dimension_numbers = #tpu.dot_dimension_numbers<[1], [0], [0], [1], [0, 0, 1, 1], [], []>} : vector<8x32xf32>, vector<32x32xf32>, vector<8x32xf32> -> vector<8x32xf32>
    %110 = vector.broadcast %10 : vector<1x32xf32> to vector<8x32xf32>
    %111 = arith.addf %109, %110 : vector<8x32xf32>
    %112 = arith.addf %1, %111 : vector<8x32xf32>
    %cst_44 = arith.constant dense<0.000000e+00> : vector<8xf32>
    %113 = vector.multi_reduction <add>, %112, %cst_44 [1] : vector<8x32xf32> to vector<8xf32>
    %114 = vector.shape_cast %113 : vector<8xf32> to vector<8x1xf32>
    %cst_45 = arith.constant 3.200000e+01 : f32
    %115 = vector.broadcast %cst_45 : f32 to vector<8x1xf32>
    %116 = arith.divf %114, %115 : vector<8x1xf32>
    %117 = vector.broadcast %116 : vector<8x1xf32> to vector<8x32xf32>
    %118 = arith.subf %112, %117 : vector<8x32xf32>
    %119 = arith.mulf %118, %118 : vector<8x32xf32>
    %cst_46 = arith.constant dense<0.000000e+00> : vector<8xf32>
    %120 = vector.multi_reduction <add>, %119, %cst_46 [1] : vector<8x32xf32> to vector<8xf32>
    %121 = vector.shape_cast %120 : vector<8xf32> to vector<8x1xf32>
    %cst_47 = arith.constant 3.200000e+01 : f32
    %122 = vector.broadcast %cst_47 : f32 to vector<8x1xf32>
    %123 = arith.divf %121, %122 : vector<8x1xf32>
    %124 = vector.broadcast %116 : vector<8x1xf32> to vector<8x32xf32>
    %125 = arith.subf %112, %124 : vector<8x32xf32>
    %cst_48 = arith.constant 9.99999974E-6 : f32
    %126 = vector.broadcast %cst_48 : f32 to vector<8x1xf32>
    %127 = arith.addf %123, %126 : vector<8x1xf32>
    %128 = math.rsqrt %127 : vector<8x1xf32>
    %129 = vector.broadcast %128 : vector<8x1xf32> to vector<8x32xf32>
    %130 = arith.mulf %125, %129 : vector<8x32xf32>
    %131 = vector.broadcast %13 : vector<1x32xf32> to vector<8x32xf32>
    %132 = arith.mulf %130, %131 : vector<8x32xf32>
    %133 = vector.broadcast %14 : vector<1x32xf32> to vector<8x32xf32>
    %134 = arith.addf %132, %133 : vector<8x32xf32>
    %cst_49 = arith.constant dense<0.000000e+00> : vector<8x32xf32>
    %135 = tpu.matmul %134, %26, %cst_49 {dimension_numbers = #tpu.dot_dimension_numbers<[1], [0], [0], [1], [0, 0, 1, 1], [], []>} : vector<8x32xf32>, vector<32x32xf32>, vector<8x32xf32> -> vector<8x32xf32>
    %136 = vector.broadcast %11 : vector<1x32xf32> to vector<8x32xf32>
    %137 = arith.addf %135, %136 : vector<8x32xf32>
    %cst_50 = arith.constant 0.000000e+00 : f32
    %138 = vector.broadcast %cst_50 : f32 to vector<8x32xf32>
    %139 = arith.maximumf %137, %138 : vector<8x32xf32>
    %cst_51 = arith.constant dense<0.000000e+00> : vector<8x32xf32>
    %140 = tpu.matmul %139, %28, %cst_51 {dimension_numbers = #tpu.dot_dimension_numbers<[1], [0], [0], [1], [0, 0, 1, 1], [], []>} : vector<8x32xf32>, vector<32x32xf32>, vector<8x32xf32> -> vector<8x32xf32>
    %141 = vector.broadcast %12 : vector<1x32xf32> to vector<8x32xf32>
    %142 = arith.addf %140, %141 : vector<8x32xf32>
    %143 = arith.addf %134, %142 : vector<8x32xf32>
    %cst_52 = arith.constant dense<0.000000e+00> : vector<8xf32>
    %144 = vector.multi_reduction <add>, %143, %cst_52 [1] : vector<8x32xf32> to vector<8xf32>
    %145 = vector.shape_cast %144 : vector<8xf32> to vector<8x1xf32>
    %cst_53 = arith.constant 3.200000e+01 : f32
    %146 = vector.broadcast %cst_53 : f32 to vector<8x1xf32>
    %147 = arith.divf %145, %146 : vector<8x1xf32>
    %148 = vector.broadcast %147 : vector<8x1xf32> to vector<8x32xf32>
    %149 = arith.subf %143, %148 : vector<8x32xf32>
    %150 = arith.mulf %149, %149 : vector<8x32xf32>
    %cst_54 = arith.constant dense<0.000000e+00> : vector<8xf32>
    %151 = vector.multi_reduction <add>, %150, %cst_54 [1] : vector<8x32xf32> to vector<8xf32>
    %152 = vector.shape_cast %151 : vector<8xf32> to vector<8x1xf32>
    %cst_55 = arith.constant 3.200000e+01 : f32
    %153 = vector.broadcast %cst_55 : f32 to vector<8x1xf32>
    %154 = arith.divf %152, %153 : vector<8x1xf32>
    %155 = vector.broadcast %147 : vector<8x1xf32> to vector<8x32xf32>
    %156 = arith.subf %143, %155 : vector<8x32xf32>
    %cst_56 = arith.constant 9.99999974E-6 : f32
    %157 = vector.broadcast %cst_56 : f32 to vector<8x1xf32>
    %158 = arith.addf %154, %157 : vector<8x1xf32>
    %159 = math.rsqrt %158 : vector<8x1xf32>
    %160 = vector.broadcast %159 : vector<8x1xf32> to vector<8x32xf32>
    %161 = arith.mulf %156, %160 : vector<8x32xf32>
    %162 = vector.broadcast %15 : vector<1x32xf32> to vector<8x32xf32>
    %163 = arith.mulf %161, %162 : vector<8x32xf32>
    %164 = vector.broadcast %16 : vector<1x32xf32> to vector<8x32xf32>
    %165 = arith.addf %163, %164 : vector<8x32xf32>
    %c0_57 = arith.constant 0 : index
    %c0_58 = arith.constant 0 : index
    %c0_59 = arith.constant 0 : index
    %166 = vector.load %arg6[%c0_57, %c0_58, %c0_59] : memref<1x8x32xf32, #tpu.memory_space<vmem>>, vector<1x8x32xf32>
    %167 = vector.shape_cast %166 : vector<1x8x32xf32> to vector<8x32xf32>
    %168 = vector.shape_cast %165 : vector<8x32xf32> to vector<1x8x32xf32>
    tpu.vector_store %arg6[%c0_57, %c0_58, %c0_59], %168 {strides = array<i32>} : memref<1x8x32xf32, #tpu.memory_space<vmem>>, vector<1x8x32xf32>,
    return
  }
  func.func @transform_0(%arg0: i32) -> (i32, i32, i32) {
    %c0_i32 = arith.constant 0 : i32
    %c0_i32_0 = arith.constant 0 : i32
    %c0_i32_1 = arith.constant 0 : i32
    return %arg0, %c0_i32, %c0_i32_0 : i32, i32, i32
  }
  func.func @transform_1(%arg0: i32) -> (i32, i32, i32) {
    %c0_i32 = arith.constant 0 : i32
    %c0_i32_0 = arith.constant 0 : i32
    %c0_i32_1 = arith.constant 0 : i32
    return %arg0, %c0_i32, %c0_i32_0 : i32, i32, i32
  }
  func.func @transform_2(%arg0: i32) -> (i32, i32, i32) {
    %c0_i32 = arith.constant 0 : i32
    %c0_i32_0 = arith.constant 0 : i32
    %c0_i32_1 = arith.constant 0 : i32
    return %arg0, %c0_i32, %c0_i32_0 : i32, i32, i32
  }
  func.func @transform_3(%arg0: i32) -> (i32, i32, i32) {
    %c0_i32 = arith.constant 0 : i32
    %c0_i32_0 = arith.constant 0 : i32
    %c0_i32_1 = arith.constant 0 : i32
    %c0_i32_2 = arith.constant 0 : i32
    return %c0_i32, %c0_i32_0, %c0_i32_1 : i32, i32, i32
  }
  func.func @transform_4(%arg0: i32) -> (i32, i32) {
    %c0_i32 = arith.constant 0 : i32
    %c0_i32_0 = arith.constant 0 : i32
    %c0_i32_1 = arith.constant 0 : i32
    return %c0_i32, %c0_i32_0 : i32, i32
  }
  func.func @transform_5(%arg0: i32) -> (i32, i32, i32) {
    %c0_i32 = arith.constant 0 : i32
    %c0_i32_0 = arith.constant 0 : i32
    %c0_i32_1 = arith.constant 0 : i32
    return %arg0, %c0_i32, %c0_i32_0 : i32, i32, i32
  }
}

</mosaic_0001>

<llo_original>
// kernel: blocks_forward.1
$region0: #{blocks_forward.1}
  #allocation0 [shape = 'u32[]', space=smem, size = 0x4, offset = 0x4, fixed_abs, tag = 'smem constant byte address 0x4 - core index']
  #allocation1 [shape = 'u32[144,128]{1,0:T(1,128)}', space=vmem, size = 0x12000, scoped, tag = 'internal scratch']
  %s0 = inlined_call_operand.hbm [shape: f32[2,8,32], index: 0, kind: input, shape index: {}]
  %s1 = inlined_call_operand.hbm [shape: f32[2,8,32], index: 1, kind: input, shape index: {}]
  %s2 = inlined_call_operand.hbm [shape: f32[2,8,32], index: 2, kind: input, shape index: {}]
  %s3 = inlined_call_operand.hbm [shape: f32[6,32,32], index: 3, kind: input, shape index: {}]
  %s4 = inlined_call_operand.hbm [shape: f32[16,32], index: 4, kind: input, shape index: {}]
  %s5 = inlined_call_operand.hbm [shape: f32[2,8,32], index: 5, kind: output, shape index: {}]
  %s6 = sld [smem:[#allocation0]]
  $region73: #{blocks_forward.1} parent=0
    _
  %s8 = ssub.s32 1, %s6
  %s9 = scalar_select 0, %s8, %s6
  $region1: #{blocks_forward.1} parent=0
    #allocation2 [shape = 'u8[8192]{0}', space=vmem, size = 0x2000, scoped, tag = 'input window, operand 0']
    #allocation3 [shape = 's32[2]{0}', space=sflag, size = 0x8, scoped, tag = 'scoped memory for blocks_forward.1']
    #allocation4 [shape = 's32[2]{0}', space=sflag, size = 0x8, scoped, tag = 'scoped memory for blocks_forward.1']
    #allocation5 [shape = 'u8[8192]{0}', space=vmem, size = 0x2000, scoped, tag = 'input window, operand 1']
    #allocation6 [shape = 's32[2]{0}', space=sflag, size = 0x8, scoped, tag = 'scoped memory for blocks_forward.1']
    #allocation7 [shape = 'u8[8192]{0}', space=vmem, size = 0x2000, scoped, tag = 'input window, operand 2']
    #allocation8 [shape = 'u8[98304]{0}', space=vmem, size = 0x18000, scoped, tag = 'input window, operand 3, single buffered']
    #allocation9 [shape = 's32[1]{0}', space=sflag, size = 0x4, scoped, tag = 'scoped memory for blocks_forward.1']
    #allocation10 [shape = 'u8[8192]{0}', space=vmem, size = 0x2000, scoped, tag = 'input window, operand 4, single buffered']
    #allocation11 [shape = 'u8[8192]{0}', space=vmem, size = 0x2000, scoped, tag = 'output window, operand 0']
    %10 = vsyncpa [#allocation3], 0
    %s11 = scalar_lea.sflag [#allocation3], 1
    %12 = vsyncpa %s11, 0
    %13 = vsyncpa [#allocation6], 0
    %s14 = scalar_lea.sflag [#allocation6], 1
    %15 = vsyncpa %s14, 0
    %16 = vsyncpa [#allocation9], 0
    %17 = vsyncpa [#allocation4], 0
    %s18 = scalar_lea.sflag [#allocation4], 1
    %19 = vsyncpa %s18, 0
    loop: start=0, step=1, limit=4
    $region2: #{blocks_forward.1} parent=1 // loop_pre_header
      _
    $region3: #{blocks_forward.1} parent=1 // loop_header
      %s21 = sphi 0, %s25
      %p22 = scmp.ge.s32.totalorder %s21, 4
      %s31 = sphi 0, %s33
      %s34 = sphi 0, %s31
      %s35 = sphi 0, %s34
      %s51 = sphi 0, %s35
      %s57 = sphi 0, %s59
      %s60 = sphi 0, %s57
      %s61 = sphi 0, %s60
      %s77 = sphi 0, %s61
      %s83 = sphi 0, %s85
      %s86 = sphi 0, %s83
      %s87 = sphi 0, %s86
      %s103 = sphi 0, %s87
      %s107 = sphi 0, %s107
      %s109 = sphi 0, %s107
      %s110 = sphi 0, %s109
      %s124 = sphi 0, %s110
      %s128 = sphi 0, %s128
      %s130 = sphi 0, %s128
      %s131 = sphi 0, %s130
      %s145 = sphi 0, %s131
      %s151 = sphi 0, %s153
      %s154 = sphi 0, %s151
      %s155 = sphi 0, %s154
      %s171 = sphi 0, %s155
    $region4: #{blocks_forward.1} parent=1 // loop_header_branch
      %24 = sbr.rel (%p22) target = $region8
    $region5: #{blocks_forward.1} parent=1 // loop_body
      %s26 = ssub.s32 %s21, 1
      %s27 = ssub.s32 %s21, 2
      %s28 = sadd.s32 %s21, 1
      %s29 = ssub.s32 %s21, %s28
      %p30 = scmp.eq.s32.totalorder %s29, 0
      %s32 = sadd.s32 %s31, 1
      %s33 = scalar_select %p30, %s31, %s32
      %p36 = pneg %p30
      %p37 = scmp.eq.s32.totalorder %s21, 1
      %p38 = por %p36, %p37
      %p39 = scmp.ne.s32.totalorder %s31, %s34
      %p40 = scmp.eq.s32.totalorder %s21, 0
      %p41 = por %p39, %p40
      %p42 = scmp.ne.s32.totalorder %s31, %s34
      %p43 = scmp.eq.s32.totalorder %s26, 1
      %p44 = por %p42, %p43
      %p45 = scmp.ne.s32.totalorder %s34, %s35
      %p46 = scmp.eq.s32.totalorder %s26, 0
      %p47 = por %p45, %p46
      %p48 = scmp.ne.s32.totalorder %s34, %s35
      %p49 = scmp.eq.s32.totalorder %s27, 1
      %p50 = por %p48, %p49
      %p52 = scmp.ne.s32.totalorder %s35, %s51
      %p53 = scmp.eq.s32.totalorder %s27, 0
      %p54 = por %p52, %p53
      %s55 = ssub.s32 %s21, %s28
      %p56 = scmp.eq.s32.totalorder %s55, 0
      %s58 = sadd.s32 %s57, 1
      %s59 = scalar_select %p56, %s57, %s58
      %p62 = pneg %p56
      %p63 = scmp.eq.s32.totalorder %s21, 1
      %p64 = por %p62, %p63
      %p65 = scmp.ne.s32.totalorder %s57, %s60
      %p66 = scmp.eq.s32.totalorder %s21, 0
      %p67 = por %p65, %p66
      %p68 = scmp.ne.s32.totalorder %s57, %s60
      %p69 = scmp.eq.s32.totalorder %s26, 1
      %p70 = por %p68, %p69
      %p71 = scmp.ne.s32.totalorder %s60, %s61
      %p72 = scmp.eq.s32.totalorder %s26, 0
      %p73 = por %p71, %p72
      %p74 = scmp.ne.s32.totalorder %s60, %s61
      %p75 = scmp.eq.s32.totalorder %s27, 1
      %p76 = por %p74, %p75
      %p78 = scmp.ne.s32.totalorder %s61, %s77
      %p79 = scmp.eq.s32.totalorder %s27, 0
      %p80 = por %p78, %p79
      %s81 = ssub.s32 %s21, %s28
      %p82 = scmp.eq.s32.totalorder %s81, 0
      %s84 = sadd.s32 %s83, 1
      %s85 = scalar_select %p82, %s83, %s84
      %p88 = pneg %p82
      %p89 = scmp.eq.s32.totalorder %s21, 1
      %p90 = por %p88, %p89
      %p91 = scmp.ne.s32.totalorder %s83, %s86
      %p92 = scmp.eq.s32.totalorder %s21, 0
      %p93 = por %p91, %p92
      %p94 = scmp.ne.s32.totalorder %s83, %s86
      %p95 = scmp.eq.s32.totalorder %s26, 1
      %p96 = por %p94, %p95
      %p97 = scmp.ne.s32.totalorder %s86, %s87
      %p98 = scmp.eq.s32.totalorder %s26, 0
      %p99 = por %p97, %p98
      %p100 = scmp.ne.s32.totalorder %s86, %s87
      %p101 = scmp.eq.s32.totalorder %s27, 1
      %p102 = por %p100, %p101
      %p104 = scmp.ne.s32.totalorder %s87, %s103
      %p105 = scmp.eq.s32.totalorder %s27, 0
      %p106 = por %p104, %p105
      %s108 = sadd.s32 %s107, 1
      %p111 = scmp.eq.s32.totalorder %s21, 1
      %p112 = scmp.ne.s32.totalorder %s107, %s109
      %p113 = scmp.eq.s32.totalorder %s21, 0
      %p114 = por %p112, %p113
      %p115 = scmp.ne.s32.totalorder %s107, %s109
      %p116 = scmp.eq.s32.totalorder %s26, 1
      %p117 = por %p115, %p116
      %p118 = scmp.ne.s32.totalorder %s109, %s110
      %p119 = scmp.eq.s32.totalorder %s26, 0
      %p120 = por %p118, %p119
      %p121 = scmp.ne.s32.totalorder %s109, %s110
      %p122 = scmp.eq.s32.totalorder %s27, 1
      %p123 = por %p121, %p122
      %p125 = scmp.ne.s32.totalorder %s110, %s124
      %p126 = scmp.eq.s32.totalorder %s27, 0
      %p127 = por %p125, %p126
      %s129 = sadd.s32 %s128, 1
      %p132 = scmp.eq.s32.totalorder %s21, 1
      %p133 = scmp.ne.s32.totalorder %s128, %s130
      %p134 = scmp.eq.s32.totalorder %s21, 0
      %p135 = por %p133, %p134
      %p136 = scmp.ne.s32.totalorder %s128, %s130
      %p137 = scmp.eq.s32.totalorder %s26, 1
      %p138 = por %p136, %p137
      %p139 = scmp.ne.s32.totalorder %s130, %s131
      %p140 = scmp.eq.s32.totalorder %s26, 0
      %p141 = por %p139, %p140
      %p142 = scmp.ne.s32.totalorder %s130, %s131
      %p143 = scmp.eq.s32.totalorder %s27, 1
      %p144 = por %p142, %p143
      %p146 = scmp.ne.s32.totalorder %s131, %s145
      %p147 = scmp.eq.s32.totalorder %s27, 0
      %p148 = por %p146, %p147
      %s149 = ssub.s32 %s21, %s28
      %p150 = scmp.eq.s32.totalorder %s149, 0
      %s152 = sadd.s32 %s151, 1
      %s153 = scalar_select %p150, %s151, %s152
      %p156 = pneg %p150
      %p157 = scmp.eq.s32.totalorder %s21, 1
      %p158 = por %p156, %p157
      %p159 = scmp.ne.s32.totalorder %s151, %s154
      %p160 = scmp.eq.s32.totalorder %s21, 0
      %p161 = por %p159, %p160
      %p162 = scmp.ne.s32.totalorder %s151, %s154
      %p163 = scmp.eq.s32.totalorder %s26, 1
      %p164 = por %p162, %p163
      %p165 = scmp.ne.s32.totalorder %s154, %s155
      %p166 = scmp.eq.s32.totalorder %s26, 0
      %p167 = por %p165, %p166
      %p168 = scmp.ne.s32.totalorder %s154, %s155
      %p169 = scmp.eq.s32.totalorder %s27, 1
      %p170 = por %p168, %p169
      %p172 = scmp.ne.s32.totalorder %s155, %s171
      %p173 = scmp.eq.s32.totalorder %s27, 0
      %p174 = por %p172, %p173
      %p175 = scmp.le.s32.totalorder 1, %s21
      %p176 = scmp.lt.s32.totalorder %s21, 3
      %p177 = pnand %p175, %p176
      %p178 = pneg %p177
      // Predicated region
      $region9: #{blocks_forward.1} parent=5 // pred_check
        _
      $region10: #{blocks_forward.1} parent=5 // pred_check_branch
        %180 = sbr.rel (%p177) target = $region12
      $region11: #{blocks_forward.1} parent=5 // pred_region
        %s181 = ssub.s32 %s21, 1
        // Predicated region
        $region13: #{blocks_forward.1} parent=11 // pred_check
          %p182 = pneg %p120
        $region14: #{blocks_forward.1} parent=11 // pred_check_branch
          %184 = sbr.rel (%p182) target = $region16
        $region15: #{blocks_forward.1} parent=11 // pred_region
          %s186 = ssub.s32 3072, 3072
          %187 = vsyncadd [#allocation9], %s186
          %s188 = sshll.u32 [#allocation8], 4
          %s189 = int_to_ptr.vmem [resolvable:$true] %s188
          %194 = dma.hbm_to_vmem [thread:$0]  %s3, 3072, %s189, [#allocation9], 128, 128, 8
        $region16: #{blocks_forward.1} parent=11 // pred_fallthru
          _
        // Predicated region
        $region17: #{blocks_forward.1} parent=11 // pred_check
          %p195 = pneg %p141
        $region18: #{blocks_forward.1} parent=11 // pred_check_branch
          %197 = sbr.rel (%p195) target = $region20
        $region19: #{blocks_forward.1} parent=11 // pred_region
          %s199 = ssub.s32 256, 256
          %200 = vsyncadd [#allocation9], %s199
          %s201 = sshll.u32 [#allocation10], 4
          %s202 = int_to_ptr.vmem [resolvable:$true] %s201
          %207 = dma.hbm_to_vmem [thread:$0]  %s4, 256, %s202, [#allocation9], 128, 128, 8
        $region20: #{blocks_forward.1} parent=11 // pred_fallthru
          _
      $region12: #{blocks_forward.1} parent=5 // pred_fallthru
        _
      %p208 = scmp.lt.s32.totalorder %s21, 2
      // Predicated region
      $region21: #{blocks_forward.1} parent=5 // pred_check
        %p209 = pneg %p208
      $region22: #{blocks_forward.1} parent=5 // pred_check_branch
        %211 = sbr.rel (%p209) target = $region24
      $region23: #{blocks_forward.1} parent=5 // pred_region
        // Predicated region
        $region25: #{blocks_forward.1} parent=23 // pred_check
          %p212 = pneg %p41
        $region26: #{blocks_forward.1} parent=23 // pred_check_branch
          %214 = sbr.rel (%p212) target = $region28
        $region27: #{blocks_forward.1} parent=23 // pred_region
          %s215 = sand.u32 %s31, 1
          %s216 = scalar_lea.sflag [#allocation3], %s215
          %s217 = sand.u32 %s31, 1
          %s218 = smul.addr %s217, 8
          %s219 = scalar_lea.vmem [#allocation2], %s218
          %s221 = ssub.s32 128, 128
          %222 = vsyncadd %s216, %s221
          %s223 = smul.addr %s21, 128
          %s224 = scalar_lea.hbm %s0, %s223
          %s226 = sshll.u32 %s219, 4
          %s227 = int_to_ptr.vmem [resolvable:$true] %s226
          %229 = dma.hbm_to_vmem [thread:$0]  %s224, 128, %s227, %s216
        $region28: #{blocks_forward.1} parent=23 // pred_fallthru
          _
        // Predicated region
        $region29: #{blocks_forward.1} parent=23 // pred_check
          %p230 = pneg %p67
        $region30: #{blocks_forward.1} parent=23 // pred_check_branch
          %232 = sbr.rel (%p230) target = $region32
        $region31: #{blocks_forward.1} parent=23 // pred_region
          %s233 = sand.u32 %s21, 1
          %s234 = scalar_lea.sflag [#allocation6], %s233
          %s235 = sand.u32 %s57, 1
          %s236 = smul.addr %s235, 8
          %s237 = scalar_lea.vmem [#allocation5], %s236
          %s239 = ssub.s32 128, 128
          %240 = vsyncadd %s234, %s239
          %s241 = smul.addr %s21, 128
          %s242 = scalar_lea.hbm %s1, %s241
          %s244 = sshll.u32 %s237, 4
          %s245 = int_to_ptr.vmem [resolvable:$true] %s244
          %247 = dma.hbm_to_vmem [thread:$0]  %s242, 128, %s245, %s234
        $region32: #{blocks_forward.1} parent=23 // pred_fallthru
          _
        // Predicated region
        $region33: #{blocks_forward.1} parent=23 // pred_check
          %p248 = pneg %p93
        $region34: #{blocks_forward.1} parent=23 // pred_check_branch
          %250 = sbr.rel (%p248) target = $region36
        $region35: #{blocks_forward.1} parent=23 // pred_region
          %s251 = sand.u32 %s21, 1
          %s252 = scalar_lea.sflag [#allocation6], %s251
          %s253 = sand.u32 %s83, 1
          %s254 = smul.addr %s253, 8
          %s255 = scalar_lea.vmem [#allocation7], %s254
          %s257 = ssub.s32 128, 128
          %258 = vsyncadd %s252, %s257
          %s259 = smul.addr %s21, 128
          %s260 = scalar_lea.hbm %s2, %s259
          %s262 = sshll.u32 %s255, 4
          %s263 = int_to_ptr.vmem [resolvable:$true] %s262
          %265 = dma.hbm_to_vmem [thread:$0]  %s260, 128, %s263, %s252
        $region36: #{blocks_forward.1} parent=23 // pred_fallthru
          _
      $region24: #{blocks_forward.1} parent=5 // pred_fallthru
        _
      %p266 = scmp.le.s32.totalorder 1, %s21
      %p267 = scmp.lt.s32.totalorder %s21, 3
      %p268 = pnand %p266, %p267
      %p269 = pneg %p268
      // Predicated region
      $region37: #{blocks_forward.1} parent=5 // pred_check
        _
      $region38: #{blocks_forward.1} parent=5 // pred_check_branch
        %271 = sbr.rel (%p268) target = $region40
      $region39: #{blocks_forward.1} parent=5 // pred_region
        %s272 = ssub.s32 %s21, 1
        %s273 = sand.u32 %s34, 1
        %s274 = scalar_lea.sflag [#allocation3], %s273
        %s275 = sand.u32 %s34, 1
        %s276 = smul.addr %s275, 8
        %s277 = scalar_lea.vmem [#allocation2], %s276
        // Predicated region
        $region41: #{blocks_forward.1} parent=39 // pred_check
          %p278 = pneg %p47
        $region42: #{blocks_forward.1} parent=39 // pred_check_branch
          %280 = sbr.rel (%p278) target = $region44
        $region43: #{blocks_forward.1} parent=39 // pred_region
          %281 = dma.done %s274, 128
        $region44: #{blocks_forward.1} parent=39 // pred_fallthru
          _
        %s282 = sand.u32 %s26, 1
        %s283 = scalar_lea.sflag [#allocation6], %s282
        %s284 = sand.u32 %s60, 1
        %s285 = smul.addr %s284, 8
        %s286 = scalar_lea.vmem [#allocation5], %s285
        // Predicated region
        $region45: #{blocks_forward.1} parent=39 // pred_check
          %p287 = pneg %p73
        $region46: #{blocks_forward.1} parent=39 // pred_check_branch
          %289 = sbr.rel (%p287) target = $region48
        $region47: #{blocks_forward.1} parent=39 // pred_region
          %290 = dma.done %s283, 128
        $region48: #{blocks_forward.1} parent=39 // pred_fallthru
          _
        %s291 = sand.u32 %s26, 1
        %s292 = scalar_lea.sflag [#allocation6], %s291
        %s293 = sand.u32 %s86, 1
        %s294 = smul.addr %s293, 8
        %s295 = scalar_lea.vmem [#allocation7], %s294
        // Predicated region
        $region49: #{blocks_forward.1} parent=39 // pred_check
          %p296 = pneg %p99
        $region50: #{blocks_forward.1} parent=39 // pred_check_branch
          %298 = sbr.rel (%p296) target = $region52
        $region51: #{blocks_forward.1} parent=39 // pred_region
          %299 = dma.done %s292, 128
        $region52: #{blocks_forward.1} parent=39 // pred_fallthru
          _
        // Predicated region
        $region53: #{blocks_forward.1} parent=39 // pred_check
          %p300 = pneg %p120
        $region54: #{blocks_forward.1} parent=39 // pred_check_branch
          %302 = sbr.rel (%p300) target = $region56
        $region55: #{blocks_forward.1} parent=39 // pred_region
          %303 = dma.done [#allocation9], 3072
        $region56: #{blocks_forward.1} parent=39 // pred_fallthru
          _
        // Predicated region
        $region57: #{blocks_forward.1} parent=39 // pred_check
          %p304 = pneg %p141
        $region58: #{blocks_forward.1} parent=39 // pred_check_branch
          %306 = sbr.rel (%p304) target = $region60
        $region59: #{blocks_forward.1} parent=39 // pred_region
          %307 = dma.done [#allocation9], 256
        $region60: #{blocks_forward.1} parent=39 // pred_fallthru
          _
        %s308 = sand.u32 %s34, 1
        %s309 = scalar_lea.sflag [#allocation3], %s308
        %s310 = sand.u32 %s34, 1
        %s311 = smul.addr %s310, 8
        %s312 = scalar_lea.vmem [#allocation2], %s311
        %p313 = pneg %p47
        %p314 = pneg %p44
        %s315 = sand.u32 %s26, 1
        %s316 = scalar_lea.sflag [#allocation6], %s315
        %s317 = sand.u32 %s60, 1
        %s318 = smul.addr %s317, 8
        %s319 = scalar_lea.vmem [#allocation5], %s318
        %p320 = pneg %p73
        %p321 = pneg %p70
        %s322 = sand.u32 %s26, 1
        %s323 = scalar_lea.sflag [#allocation6], %s322
        %s324 = sand.u32 %s86, 1
        %s325 = smul.addr %s324, 8
        %s326 = scalar_lea.vmem [#allocation7], %s325
        %p327 = pneg %p99
        %p328 = pneg %p96
        %p329 = pneg %p120
        %p330 = pneg %p117
        %p331 = pneg %p141
        %p332 = pneg %p138
        %p333 = pneg %p167
        %p334 = pneg %p164
        %s335 = sand.u32 %s154, 1
        %s336 = scalar_lea.sflag [#allocation4], %s335
        %s337 = sand.u32 %s154, 1
        %s338 = smul.addr %s337, 8
        %s339 = scalar_lea.vmem [#allocation11], %s338
        %v340 = vld [vmem:[%s277] sm:$0xff]
        %v341 = vld [vmem:[%s286] sm:$0xff]
        %v342 = vld [vmem:[%s295] sm:$0xff]
        %v343 = vld [vmem:[#allocation10] sm:$0xff]
        %v344 = vld [vmem:[#allocation10 + $0x8] sm:$0xff]
        %v345 = vld [vmem:[#allocation8] sm:$0xff]
        %v346 = vld [vmem:[#allocation8 + $0x8] sm:$0xff]
        %v347 = vld [vmem:[#allocation8 + $0x10] sm:$0xff]
        %v348 = vld [vmem:[#allocation8 + $0x18] sm:$0xff]
        %s349 = scalar_lea.vmem [#allocation8], 32
        %v350 = vld [vmem:[%s349] sm:$0xff]
        %v351 = vld [vmem:[%s349 + $0x8] sm:$0xff]
        %v352 = vld [vmem:[%s349 + $0x10] sm:$0xff]
        %v353 = vld [vmem:[%s349 + $0x18] sm:$0xff]
        %s354 = scalar_lea.vmem [#allocation8], 64
        %v355 = vld [vmem:[%s354] sm:$0xff]
        %v356 = vld [vmem:[%s354 + $0x8] sm:$0xff]
        %v357 = vld [vmem:[%s354 + $0x10] sm:$0xff]
        %v358 = vld [vmem:[%s354 + $0x18] sm:$0xff]
        %s359 = scalar_lea.vmem [#allocation8], 96
        %v360 = vld [vmem:[%s359] sm:$0xff]
        %v361 = vld [vmem:[%s359 + $0x8] sm:$0xff]
        %v362 = vld [vmem:[%s359 + $0x10] sm:$0xff]
        %v363 = vld [vmem:[%s359 + $0x18] sm:$0xff]
        %s364 = scalar_lea.vmem [#allocation8], 128
        %v365 = vld [vmem:[%s364] sm:$0xff]
        %v366 = vld [vmem:[%s364 + $0x8] sm:$0xff]
        %v367 = vld [vmem:[%s364 + $0x10] sm:$0xff]
        %v368 = vld [vmem:[%s364 + $0x18] sm:$0xff]
        %s369 = scalar_lea.vmem [#allocation8], 160
        %v370 = vld [vmem:[%s369] sm:$0xff]
        %v371 = vld [vmem:[%s369 + $0x8] sm:$0xff]
        %v372 = vld [vmem:[%s369 + $0x10] sm:$0xff]
        %v373 = vld [vmem:[%s369 + $0x18] sm:$0xff]
        %v374 = vlaneseq
        %v375 = vshrl.u32 %v374, 7
        %v376 = vsub.s32 0, %v375
        %v377 = vrot.slane %v343, %v376
        %vm378 = vcmask 261120
        %v380 = vsel %vm378, %v340, 0
        %382 = vmatprep.subr.mxu0 0.0
        %383 = vmatpush1.msra.mxu0 %v345
        %384 = vmatprep.subr.mxu0 0.0
        %385 = vmatpush1.msra.mxu0 %v346
        %386 = vmatprep.subr.mxu0 0.0
        %387 = vmatpush1.msra.mxu0 %v347
        %388 = vmatprep.subr.mxu0 0.0
        %389 = vmatpush1.msra.mxu0 %v348
        %390 = vmatprep.subr.mxu0 0.0
        %391 = vmatpush1.msra.mxu0 0.0
        %392 = vmatprep.subr.mxu0 0.0
        %393 = vmatpush1.msra.mxu0 0.0
        %394 = vmatprep.subr.mxu0 0.0
        %395 = vmatpush1.msra.mxu0 0.0
        %396 = vmatprep.subr.mxu0 0.0
        %397 = vmatpush1.msra.mxu0 0.0
        %398 = vmatprep.subr.mxu0 0.0
        %399 = vmatpush1.msra.mxu0 0.0
        %400 = vmatprep.subr.mxu0 0.0
        %401 = vmatpush1.msra.mxu0 0.0
        %402 = vmatprep.subr.mxu0 0.0
        %403 = vmatpush1.msra.mxu0 0.0
        %404 = vmatprep.subr.mxu0 0.0
        %405 = vmatpush1.msra.mxu0 0.0
        %406 = vmatprep.subr.mxu0 0.0
        %407 = vmatpush1.msra.mxu0 0.0
        %408 = vmatprep.subr.mxu0 0.0
        %409 = vmatpush1.msra.mxu0 0.0
        %410 = vmatprep.subr.mxu0 0.0
        %411 = vmatpush1.msra.mxu0 0.0
        %412 = vmatprep.subr.mxu0 0.0
        %413 = vmatpush1.msra.mxu0 0.0
        %414 = vmatprep.subr.mxu0 0.0
        %415 = vmatpush1.msra.mxu0 0.0
        %416 = vmatprep.subr.mxu0 0.0
        %417 = vmatpush1.msra.mxu0 0.0
        %418 = vmatprep.subr.mxu0 0.0
        %419 = vmatpush1.msra.mxu0 0.0
        %420 = vmatprep.subr.mxu0 0.0
        %421 = vmatpush1.msra.mxu0 0.0
        %422 = vmatprep.subr.mxu0 0.0
        %423 = vmatpush1.msra.mxu0 0.0
        %424 = vmatprep.subr.mxu0 0.0
        %425 = vmatpush1.msra.mxu0 0.0
        %426 = vmatprep.subr.mxu0 0.0
        %427 = vmatpush1.msra.mxu0 0.0
        %428 = vmatprep.subr.mxu0 0.0
        %429 = vmatpush1.msra.mxu0 0.0
        %430 = vmatprep.subr.mxu0 0.0
        %431 = vmatpush1.msra.mxu0 0.0
        %432 = vmatprep.subr.mxu0 0.0
        %433 = vmatpush1.msra.mxu0 0.0
        %434 = vmatprep.subr.mxu0 0.0
        %435 = vmatpush1.msra.mxu0 0.0
        %436 = vmatprep.subr.mxu0 0.0
        %437 = vmatpush1.msra.mxu0 0.0
        %438 = vmatprep.subr.mxu0 0.0
        %439 = vmatpush1.msra.mxu0 0.0
        %440 = vmatprep.subr.mxu0 0.0
        %441 = vmatpush1.msra.mxu0 0.0
        %442 = vmatprep.subr.mxu0 0.0
        %443 = vmatpush1.msra.mxu0 0.0
        %444 = vmatprep.subr.mxu0 0.0
        %445 = vmatpush1.msra.mxu0 0.0
        %446 = vmatprep.mubr.f32.mxu0 0.0
        %447 = vmatmul.mubr.f32.gmra.mrb[0].mxu0 %v380
        %v448 = vpop.f32.mrb[0].mxu0
        %v449 = vadd.f32 %v377, %v448
        %v450 = vpop.f32.mrb[0].mxu0
        %451 = vdwg.mxu0
        %v452 = vlaneseq
        %v453 = vshrl.u32 %v452, 7
        %v454 = vsub.s32 1, %v453
        %v455 = vrot.slane %v343, %v454
        %v457 = vsel %vm378, %v341, 0
        %459 = vmatprep.subr.mxu0 0.0
        %460 = vmatpush1.msra.mxu0 %v350
        %461 = vmatprep.subr.mxu0 0.0
        %462 = vmatpush1.msra.mxu0 %v351
        %463 = vmatprep.subr.mxu0 0.0
        %464 = vmatpush1.msra.mxu0 %v352
        %465 = vmatprep.subr.mxu0 0.0
        %466 = vmatpush1.msra.mxu0 %v353
        %467 = vmatprep.subr.mxu0 0.0
        %468 = vmatpush1.msra.mxu0 0.0
        %469 = vmatprep.subr.mxu0 0.0
        %470 = vmatpush1.msra.mxu0 0.0
        %471 = vmatprep.subr.mxu0 0.0
        %472 = vmatpush1.msra.mxu0 0.0
        %473 = vmatprep.subr.mxu0 0.0
        %474 = vmatpush1.msra.mxu0 0.0
        %475 = vmatprep.subr.mxu0 0.0
        %476 = vmatpush1.msra.mxu0 0.0
        %477 = vmatprep.subr.mxu0 0.0
        %478 = vmatpush1.msra.mxu0 0.0
        %479 = vmatprep.subr.mxu0 0.0
        %480 = vmatpush1.msra.mxu0 0.0
        %481 = vmatprep.subr.mxu0 0.0
        %482 = vmatpush1.msra.mxu0 0.0
        %483 = vmatprep.subr.mxu0 0.0
        %484 = vmatpush1.msra.mxu0 0.0
        %485 = vmatprep.subr.mxu0 0.0
        %486 = vmatpush1.msra.mxu0 0.0
        %487 = vmatprep.subr.mxu0 0.0
        %488 = vmatpush1.msra.mxu0 0.0
        %489 = vmatprep.subr.mxu0 0.0
        %490 = vmatpush1.msra.mxu0 0.0
        %491 = vmatprep.subr.mxu0 0.0
        %492 = vmatpush1.msra.mxu0 0.0
        %493 = vmatprep.subr.mxu0 0.0
        %494 = vmatpush1.msra.mxu0 0.0
        %495 = vmatprep.subr.mxu0 0.0
        %496 = vmatpush1.msra.mxu0 0.0
        %497 = vmatprep.subr.mxu0 0.0
        %498 = vmatpush1.msra.mxu0 0.0
        %499 = vmatprep.subr.mxu0 0.0
        %500 = vmatpush1.msra.mxu0 0.0
        %501 = vmatprep.subr.mxu0 0.0
        %502 = vmatpush1.msra.mxu0 0.0
        %503 = vmatprep.subr.mxu0 0.0
        %504 = vmatpush1.msra.mxu0 0.0
        %505 = vmatprep.subr.mxu0 0.0
        %506 = vmatpush1.msra.mxu0 0.0
        %507 = vmatprep.subr.mxu0 0.0
        %508 = vmatpush1.msra.mxu0 0.0
        %509 = vmatprep.subr.mxu0 0.0
        %510 = vmatpush1.msra.mxu0 0.0
        %511 = vmatprep.subr.mxu0 0.0
        %512 = vmatpush1.msra.mxu0 0.0
        %513 = vmatprep.subr.mxu0 0.0
        %514 = vmatpush1.msra.mxu0 0.0
        %515 = vmatprep.subr.mxu0 0.0
        %516 = vmatpush1.msra.mxu0 0.0
        %517 = vmatprep.subr.mxu0 0.0
        %518 = vmatpush1.msra.mxu0 0.0
        %519 = vmatprep.subr.mxu0 0.0
        %520 = vmatpush1.msra.mxu0 0.0
        %521 = vmatprep.subr.mxu0 0.0
        %522 = vmatpush1.msra.mxu0 0.0
        %523 = vmatprep.mubr.f32.mxu0 0.0
        %524 = vmatmul.mubr.f32.gmra.mrb[0].mxu0 %v457
        %v525 = vpop.f32.mrb[0].mxu0
        %v526 = vadd.f32 %v455, %v525
        %v527 = vpop.f32.mrb[0].mxu0
        %528 = vdwg.mxu0
        %v529 = vlaneseq
        %v530 = vshrl.u32 %v529, 7
        %v531 = vsub.s32 2, %v530
        %v532 = vrot.slane %v343, %v531
        %v534 = vsel %vm378, %v342, 0
        %536 = vmatprep.subr.mxu0 0.0
        %537 = vmatpush1.msra.mxu0 %v355
        %538 = vmatprep.subr.mxu0 0.0
        %539 = vmatpush1.msra.mxu0 %v356
        %540 = vmatprep.subr.mxu0 0.0
        %541 = vmatpush1.msra.mxu0 %v357
        %542 = vmatprep.subr.mxu0 0.0
        %543 = vmatpush1.msra.mxu0 %v358
        %544 = vmatprep.subr.mxu0 0.0
        %545 = vmatpush1.msra.mxu0 0.0
        %546 = vmatprep.subr.mxu0 0.0
        %547 = vmatpush1.msra.mxu0 0.0
        %548 = vmatprep.subr.mxu0 0.0
        %549 = vmatpush1.msra.mxu0 0.0
        %550 = vmatprep.subr.mxu0 0.0
        %551 = vmatpush1.msra.mxu0 0.0
        %552 = vmatprep.subr.mxu0 0.0
        %553 = vmatpush1.msra.mxu0 0.0
        %554 = vmatprep.subr.mxu0 0.0
        %555 = vmatpush1.msra.mxu0 0.0
        %556 = vmatprep.subr.mxu0 0.0
        %557 = vmatpush1.msra.mxu0 0.0
        %558 = vmatprep.subr.mxu0 0.0
        %559 = vmatpush1.msra.mxu0 0.0
        %560 = vmatprep.subr.mxu0 0.0
        %561 = vmatpush1.msra.mxu0 0.0
        %562 = vmatprep.subr.mxu0 0.0
        %563 = vmatpush1.msra.mxu0 0.0
        %564 = vmatprep.subr.mxu0 0.0
        %565 = vmatpush1.msra.mxu0 0.0
        %566 = vmatprep.subr.mxu0 0.0
        %567 = vmatpush1.msra.mxu0 0.0
        %568 = vmatprep.subr.mxu0 0.0
        %569 = vmatpush1.msra.mxu0 0.0
        %570 = vmatprep.subr.mxu0 0.0
        %571 = vmatpush1.msra.mxu0 0.0
        %572 = vmatprep.subr.mxu0 0.0
        %573 = vmatpush1.msra.mxu0 0.0
        %574 = vmatprep.subr.mxu0 0.0
        %575 = vmatpush1.msra.mxu0 0.0
        %576 = vmatprep.subr.mxu0 0.0
        %577 = vmatpush1.msra.mxu0 0.0
        %578 = vmatprep.subr.mxu0 0.0
        %579 = vmatpush1.msra.mxu0 0.0
        %580 = vmatprep.subr.mxu0 0.0
        %581 = vmatpush1.msra.mxu0 0.0
        %582 = vmatprep.subr.mxu0 0.0
        %583 = vmatpush1.msra.mxu0 0.0
        %584 = vmatprep.subr.mxu0 0.0
        %585 = vmatpush1.msra.mxu0 0.0
        %586 = vmatprep.subr.mxu0 0.0
        %587 = vmatpush1.msra.mxu0 0.0
        %588 = vmatprep.subr.mxu0 0.0
        %589 = vmatpush1.msra.mxu0 0.0
        %590 = vmatprep.subr.mxu0 0.0
        %591 = vmatpush1.msra.mxu0 0.0
        %592 = vmatprep.subr.mxu0 0.0
        %593 = vmatpush1.msra.mxu0 0.0
        %594 = vmatprep.subr.mxu0 0.0
        %595 = vmatpush1.msra.mxu0 0.0
        %596 = vmatprep.subr.mxu0 0.0
        %597 = vmatpush1.msra.mxu0 0.0
        %598 = vmatprep.subr.mxu0 0.0
        %599 = vmatpush1.msra.mxu0 0.0
        %600 = vmatprep.mubr.f32.mxu0 0.0
        %601 = vmatmul.mubr.f32.gmra.mrb[0].mxu0 %v534
        %v602 = vpop.f32.mrb[0].mxu0
        %v603 = vadd.f32 %v532, %v602
        %v604 = vpop.f32.mrb[0].mxu0
        %605 = vdwg.mxu0
        %v606 = vlaneseq
        %v607 = vshrl.u32 %v606, 7
        %v608 = vlaneseq
        %v609 = vand.u32 %v608, 127
        %vm610 = vcmp.le.s32.totalorder %v609, %v607
        %v611 = vsel %vm610, 0.0, -1e+30
        %vm612 = vcmask 64512
        %v614 = vsel %vm612, %v449, 0
        %v617 = vsel %vm612, %v526, 0
        %619 = vmatprep.subr.mxu0 0.0
        %620 = vmatpush1.xpose.msra.mxu0 %v617
        %621 = vmatprep.subr.mxu0 0.0
        %622 = vmatpush1.xpose.msra.mxu0 0.0
        %623 = vmatprep.subr.mxu0 0.0
        %624 = vmatpush1.xpose.msra.mxu0 0.0
        %625 = vmatprep.subr.mxu0 0.0
        %626 = vmatpush1.xpose.msra.mxu0 0.0
        %627 = vmatprep.subr.mxu0 0.0
        %628 = vmatpush1.xpose.msra.mxu0 0.0
        %629 = vmatprep.subr.mxu0 0.0
        %630 = vmatpush1.xpose.msra.mxu0 0.0
        %631 = vmatprep.subr.mxu0 0.0
        %632 = vmatpush1.xpose.msra.mxu0 0.0
        %633 = vmatprep.subr.mxu0 0.0
        %634 = vmatpush1.xpose.msra.mxu0 0.0
        %635 = vmatprep.subr.mxu0 0.0
        %636 = vmatpush1.xpose.msra.mxu0 0.0
        %637 = vmatprep.subr.mxu0 0.0
        %638 = vmatpush1.xpose.msra.mxu0 0.0
        %639 = vmatprep.subr.mxu0 0.0
        %640 = vmatpush1.xpose.msra.mxu0 0.0
        %641 = vmatprep.subr.mxu0 0.0
        %642 = vmatpush1.xpose.msra.mxu0 0.0
        %643 = vmatprep.subr.mxu0 0.0
        %644 = vmatpush1.xpose.msra.mxu0 0.0
        %645 = vmatprep.subr.mxu0 0.0
        %646 = vmatpush1.xpose.msra.mxu0 0.0
        %647 = vmatprep.subr.mxu0 0.0
        %648 = vmatpush1.xpose.msra.mxu0 0.0
        %649 = vmatprep.subr.mxu0 0.0
        %650 = vmatpush1.xpose.msra.mxu0 0.0
        %651 = vmatprep.subr.mxu0 0.0
        %652 = vmatpush1.xpose.msra.mxu0 0.0
        %653 = vmatprep.subr.mxu0 0.0
        %654 = vmatpush1.xpose.msra.mxu0 0.0
        %655 = vmatprep.subr.mxu0 0.0
        %656 = vmatpush1.xpose.msra.mxu0 0.0
        %657 = vmatprep.subr.mxu0 0.0
        %658 = vmatpush1.xpose.msra.mxu0 0.0
        %659 = vmatprep.subr.mxu0 0.0
        %660 = vmatpush1.xpose.msra.mxu0 0.0
        %661 = vmatprep.subr.mxu0 0.0
        %662 = vmatpush1.xpose.msra.mxu0 0.0
        %663 = vmatprep.subr.mxu0 0.0
        %664 = vmatpush1.xpose.msra.mxu0 0.0
        %665 = vmatprep.subr.mxu0 0.0
        %666 = vmatpush1.xpose.msra.mxu0 0.0
        %667 = vmatprep.subr.mxu0 0.0
        %668 = vmatpush1.xpose.msra.mxu0 0.0
        %669 = vmatprep.subr.mxu0 0.0
        %670 = vmatpush1.xpose.msra.mxu0 0.0
        %671 = vmatprep.subr.mxu0 0.0
        %672 = vmatpush1.xpose.msra.mxu0 0.0
        %673 = vmatprep.subr.mxu0 0.0
        %674 = vmatpush1.xpose.msra.mxu0 0.0
        %675 = vmatprep.subr.mxu0 0.0
        %676 = vmatpush1.xpose.msra.mxu0 0.0
        %677 = vmatprep.subr.mxu0 0.0
        %678 = vmatpush1.xpose.msra.mxu0 0.0
        %679 = vmatprep.subr.mxu0 0.0
        %680 = vmatpush1.xpose.msra.mxu0 0.0
        %681 = vmatprep.subr.mxu0 0.0
        %682 = vmatpush1.xpose.msra.mxu0 0.0
        %683 = vmatprep.mubr.f32.mxu0 0.0
        %684 = vmatmul.mubr.f32.gmra.mrb[0].mxu0 %v614
        %v685 = vpop.f32.mrb[0].mxu0
        %v686 = vadd.f32 %v611, %v685
        %v687 = vpop.f32.mrb[0].mxu0
        %688 = vdwg.mxu0
        %v689 = vsel %vm612, %v686, -inf
        %690 = vmax.xlane.f32.xlu0 %v689
        %v691 = vpop.xlane.xlu0 %690
        %v692 = vsub.f32 %v686, %v691
        %v693 = vmul.f32 %v692, 1.442695
        %v694 = vpow.pop %v693
        %v695 = vsel %vm612, %v694, 0.0
        %696 = vadd.xlane.f32.xlu0 %v695
        %v697 = vpop.xlane.xlu0 %696
        %v698 = vrcp.pop %v697
        %v699 = vmul.f32 %v694, %v698
        %v701 = vsel %vm612, %v699, 0
        %703 = vmatprep.subr.mxu0 0.0
        %704 = vmatpush1.msra.mxu0 %v603
        %705 = vmatprep.subr.mxu0 0.0
        %706 = vmatpush1.msra.mxu0 0.0
        %707 = vmatprep.subr.mxu0 0.0
        %708 = vmatpush1.msra.mxu0 0.0
        %709 = vmatprep.subr.mxu0 0.0
        %710 = vmatpush1.msra.mxu0 0.0
        %711 = vmatprep.subr.mxu0 0.0
        %712 = vmatpush1.msra.mxu0 0.0
        %713 = vmatprep.subr.mxu0 0.0
        %714 = vmatpush1.msra.mxu0 0.0
        %715 = vmatprep.subr.mxu0 0.0
        %716 = vmatpush1.msra.mxu0 0.0
        %717 = vmatprep.subr.mxu0 0.0
        %718 = vmatpush1.msra.mxu0 0.0
        %719 = vmatprep.subr.mxu0 0.0
        %720 = vmatpush1.msra.mxu0 0.0
        %721 = vmatprep.subr.mxu0 0.0
        %722 = vmatpush1.msra.mxu0 0.0
        %723 = vmatprep.subr.mxu0 0.0
        %724 = vmatpush1.msra.mxu0 0.0
        %725 = vmatprep.subr.mxu0 0.0
        %726 = vmatpush1.msra.mxu0 0.0
        %727 = vmatprep.subr.mxu0 0.0
        %728 = vmatpush1.msra.mxu0 0.0
        %729 = vmatprep.subr.mxu0 0.0
        %730 = vmatpush1.msra.mxu0 0.0
        %731 = vmatprep.subr.mxu0 0.0
        %732 = vmatpush1.msra.mxu0 0.0
        %733 = vmatprep.subr.mxu0 0.0
        %734 = vmatpush1.msra.mxu0 0.0
        %735 = vmatprep.subr.mxu0 0.0
        %736 = vmatpush1.msra.mxu0 0.0
        %737 = vmatprep.subr.mxu0 0.0
        %738 = vmatpush1.msra.mxu0 0.0
        %739 = vmatprep.subr.mxu0 0.0
        %740 = vmatpush1.msra.mxu0 0.0
        %741 = vmatprep.subr.mxu0 0.0
        %742 = vmatpush1.msra.mxu0 0.0
        %743 = vmatprep.subr.mxu0 0.0
        %744 = vmatpush1.msra.mxu0 0.0
        %745 = vmatprep.subr.mxu0 0.0
        %746 = vmatpush1.msra.mxu0 0.0
        %747 = vmatprep.subr.mxu0 0.0
        %748 = vmatpush1.msra.mxu0 0.0
        %749 = vmatprep.subr.mxu0 0.0
        %750 = vmatpush1.msra.mxu0 0.0
        %751 = vmatprep.subr.mxu0 0.0
        %752 = vmatpush1.msra.mxu0 0.0
        %753 = vmatprep.subr.mxu0 0.0
        %754 = vmatpush1.msra.mxu0 0.0
        %755 = vmatprep.subr.mxu0 0.0
        %756 = vmatpush1.msra.mxu0 0.0
        %757 = vmatprep.subr.mxu0 0.0
        %758 = vmatpush1.msra.mxu0 0.0
        %759 = vmatprep.subr.mxu0 0.0
        %760 = vmatpush1.msra.mxu0 0.0
        %761 = vmatprep.subr.mxu0 0.0
        %762 = vmatpush1.msra.mxu0 0.0
        %763 = vmatprep.subr.mxu0 0.0
        %764 = vmatpush1.msra.mxu0 0.0
        %765 = vmatprep.subr.mxu0 0.0
        %766 = vmatpush1.msra.mxu0 0.0
        %767 = vmatprep.mubr.f32.mxu0 0.0
        %768 = vmatmul.mubr.f32.gmra.mrb[0].mxu0 %v701
        %v769 = vpop.f32.mrb[0].mxu0
        %v770 = vadd.f32 0.0, %v769
        %v771 = vpop.f32.mrb[0].mxu0
        %772 = vdwg.mxu0
        %773 = vrot.lane.b32.xlu0 %v449, 120
        %v774 = vpop.permute.xlu0 %773
        %775 = vrot.lane.b32.xlu0 %v526, 120
        %v776 = vpop.permute.xlu0 %775
        %v777 = vsel %vm612, %v774, 0
        %v779 = vsel %vm612, %v776, 0
        %781 = vmatprep.subr.mxu0 0.0
        %782 = vmatpush1.xpose.msra.mxu0 %v779
        %783 = vmatprep.subr.mxu0 0.0
        %784 = vmatpush1.xpose.msra.mxu0 0.0
        %785 = vmatprep.subr.mxu0 0.0
        %786 = vmatpush1.xpose.msra.mxu0 0.0
        %787 = vmatprep.subr.mxu0 0.0
        %788 = vmatpush1.xpose.msra.mxu0 0.0
        %789 = vmatprep.subr.mxu0 0.0
        %790 = vmatpush1.xpose.msra.mxu0 0.0
        %791 = vmatprep.subr.mxu0 0.0
        %792 = vmatpush1.xpose.msra.mxu0 0.0
        %793 = vmatprep.subr.mxu0 0.0
        %794 = vmatpush1.xpose.msra.mxu0 0.0
        %795 = vmatprep.subr.mxu0 0.0
        %796 = vmatpush1.xpose.msra.mxu0 0.0
        %797 = vmatprep.subr.mxu0 0.0
        %798 = vmatpush1.xpose.msra.mxu0 0.0
        %799 = vmatprep.subr.mxu0 0.0
        %800 = vmatpush1.xpose.msra.mxu0 0.0
        %801 = vmatprep.subr.mxu0 0.0
        %802 = vmatpush1.xpose.msra.mxu0 0.0
        %803 = vmatprep.subr.mxu0 0.0
        %804 = vmatpush1.xpose.msra.mxu0 0.0
        %805 = vmatprep.subr.mxu0 0.0
        %806 = vmatpush1.xpose.msra.mxu0 0.0
        %807 = vmatprep.subr.mxu0 0.0
        %808 = vmatpush1.xpose.msra.mxu0 0.0
        %809 = vmatprep.subr.mxu0 0.0
        %810 = vmatpush1.xpose.msra.mxu0 0.0
        %811 = vmatprep.subr.mxu0 0.0
        %812 = vmatpush1.xpose.msra.mxu0 0.0
        %813 = vmatprep.subr.mxu0 0.0
        %814 = vmatpush1.xpose.msra.mxu0 0.0
        %815 = vmatprep.subr.mxu0 0.0
        %816 = vmatpush1.xpose.msra.mxu0 0.0
        %817 = vmatprep.subr.mxu0 0.0
        %818 = vmatpush1.xpose.msra.mxu0 0.0
        %819 = vmatprep.subr.mxu0 0.0
        %820 = vmatpush1.xpose.msra.mxu0 0.0
        %821 = vmatprep.subr.mxu0 0.0
        %822 = vmatpush1.xpose.msra.mxu0 0.0
        %823 = vmatprep.subr.mxu0 0.0
        %824 = vmatpush1.xpose.msra.mxu0 0.0
        %825 = vmatprep.subr.mxu0 0.0
        %826 = vmatpush1.xpose.msra.mxu0 0.0
        %827 = vmatprep.subr.mxu0 0.0
        %828 = vmatpush1.xpose.msra.mxu0 0.0
        %829 = vmatprep.subr.mxu0 0.0
        %830 = vmatpush1.xpose.msra.mxu0 0.0
        %831 = vmatprep.subr.mxu0 0.0
        %832 = vmatpush1.xpose.msra.mxu0 0.0
        %833 = vmatprep.subr.mxu0 0.0
        %834 = vmatpush1.xpose.msra.mxu0 0.0
        %835 = vmatprep.subr.mxu0 0.0
        %836 = vmatpush1.xpose.msra.mxu0 0.0
        %837 = vmatprep.subr.mxu0 0.0
        %838 = vmatpush1.xpose.msra.mxu0 0.0
        %839 = vmatprep.subr.mxu0 0.0
        %840 = vmatpush1.xpose.msra.mxu0 0.0
        %841 = vmatprep.subr.mxu0 0.0
        %842 = vmatpush1.xpose.msra.mxu0 0.0
        %843 = vmatprep.subr.mxu0 0.0
        %844 = vmatpush1.xpose.msra.mxu0 0.0
        %845 = vmatprep.mubr.f32.mxu0 0.0
        %846 = vmatmul.mubr.f32.gmra.mrb[0].mxu0 %v777
        %v847 = vpop.f32.mrb[0].mxu0
        %v848 = vadd.f32 %v611, %v847
        %v849 = vpop.f32.mrb[0].mxu0
        %850 = vdwg.mxu0
        %v851 = vsel %vm612, %v848, -inf
        %852 = vmax.xlane.f32.xlu0 %v851
        %v853 = vpop.xlane.xlu0 %852
        %v854 = vsub.f32 %v848, %v853
        %v855 = vmul.f32 %v854, 1.442695
        %v856 = vpow.pop %v855
        %v857 = vsel %vm612, %v856, 0.0
        %858 = vadd.xlane.f32.xlu0 %v857
        %v859 = vpop.xlane.xlu0 %858
        %v860 = vrcp.pop %v859
        %v861 = vmul.f32 %v856, %v860
        %863 = vrot.lane.b32.xlu0 %v603, 120
        %v864 = vpop.permute.xlu0 %863
        %v867 = vsel %vm612, %v861, 0
        %869 = vmatprep.subr.mxu0 0.0
        %870 = vmatpush1.msra.mxu0 %v864
        %871 = vmatprep.subr.mxu0 0.0
        %872 = vmatpush1.msra.mxu0 0.0
        %873 = vmatprep.subr.mxu0 0.0
        %874 = vmatpush1.msra.mxu0 0.0
        %875 = vmatprep.subr.mxu0 0.0
        %876 = vmatpush1.msra.mxu0 0.0
        %877 = vmatprep.subr.mxu0 0.0
        %878 = vmatpush1.msra.mxu0 0.0
        %879 = vmatprep.subr.mxu0 0.0
        %880 = vmatpush1.msra.mxu0 0.0
        %881 = vmatprep.subr.mxu0 0.0
        %882 = vmatpush1.msra.mxu0 0.0
        %883 = vmatprep.subr.mxu0 0.0
        %884 = vmatpush1.msra.mxu0 0.0
        %885 = vmatprep.subr.mxu0 0.0
        %886 = vmatpush1.msra.mxu0 0.0
        %887 = vmatprep.subr.mxu0 0.0
        %888 = vmatpush1.msra.mxu0 0.0
        %889 = vmatprep.subr.mxu0 0.0
        %890 = vmatpush1.msra.mxu0 0.0
        %891 = vmatprep.subr.mxu0 0.0
        %892 = vmatpush1.msra.mxu0 0.0
        %893 = vmatprep.subr.mxu0 0.0
        %894 = vmatpush1.msra.mxu0 0.0
        %895 = vmatprep.subr.mxu0 0.0
        %896 = vmatpush1.msra.mxu0 0.0
        %897 = vmatprep.subr.mxu0 0.0
        %898 = vmatpush1.msra.mxu0 0.0
        %899 = vmatprep.subr.mxu0 0.0
        %900 = vmatpush1.msra.mxu0 0.0
        %901 = vmatprep.subr.mxu0 0.0
        %902 = vmatpush1.msra.mxu0 0.0
        %903 = vmatprep.subr.mxu0 0.0
        %904 = vmatpush1.msra.mxu0 0.0
        %905 = vmatprep.subr.mxu0 0.0
        %906 = vmatpush1.msra.mxu0 0.0
        %907 = vmatprep.subr.mxu0 0.0
        %908 = vmatpush1.msra.mxu0 0.0
        %909 = vmatprep.subr.mxu0 0.0
        %910 = vmatpush1.msra.mxu0 0.0
        %911 = vmatprep.subr.mxu0 0.0
        %912 = vmatpush1.msra.mxu0 0.0
        %913 = vmatprep.subr.mxu0 0.0
        %914 = vmatpush1.msra.mxu0 0.0
        %915 = vmatprep.subr.mxu0 0.0
        %916 = vmatpush1.msra.mxu0 0.0
        %917 = vmatprep.subr.mxu0 0.0
        %918 = vmatpush1.msra.mxu0 0.0
        %919 = vmatprep.subr.mxu0 0.0
        %920 = vmatpush1.msra.mxu0 0.0
        %921 = vmatprep.subr.mxu0 0.0
        %922 = vmatpush1.msra.mxu0 0.0
        %923 = vmatprep.subr.mxu0 0.0
        %924 = vmatpush1.msra.mxu0 0.0
        %925 = vmatprep.subr.mxu0 0.0
        %926 = vmatpush1.msra.mxu0 0.0
        %927 = vmatprep.subr.mxu0 0.0
        %928 = vmatpush1.msra.mxu0 0.0
        %929 = vmatprep.subr.mxu0 0.0
        %930 = vmatpush1.msra.mxu0 0.0
        %931 = vmatprep.subr.mxu0 0.0
        %932 = vmatpush1.msra.mxu0 0.0
        %933 = vmatprep.mubr.f32.mxu0 0.0
        %934 = vmatmul.mubr.f32.gmra.mrb[0].mxu0 %v867
        %v935 = vpop.f32.mrb[0].mxu0
        %v936 = vadd.f32 0.0, %v935
        %v937 = vpop.f32.mrb[0].mxu0
        %938 = vdwg.mxu0
        %939 = vrot.lane.b32.xlu0 %v449, 112
        %v940 = vpop.permute.xlu0 %939
        %941 = vrot.lane.b32.xlu0 %v526, 112
        %v942 = vpop.permute.xlu0 %941
        %v943 = vsel %vm612, %v940, 0
        %v945 = vsel %vm612, %v942, 0
        %947 = vmatprep.subr.mxu0 0.0
        %948 = vmatpush1.xpose.msra.mxu0 %v945
        %949 = vmatprep.subr.mxu0 0.0
        %950 = vmatpush1.xpose.msra.mxu0 0.0
        %951 = vmatprep.subr.mxu0 0.0
        %952 = vmatpush1.xpose.msra.mxu0 0.0
        %953 = vmatprep.subr.mxu0 0.0
        %954 = vmatpush1.xpose.msra.mxu0 0.0
        %955 = vmatprep.subr.mxu0 0.0
        %956 = vmatpush1.xpose.msra.mxu0 0.0
        %957 = vmatprep.subr.mxu0 0.0
        %958 = vmatpush1.xpose.msra.mxu0 0.0
        %959 = vmatprep.subr.mxu0 0.0
        %960 = vmatpush1.xpose.msra.mxu0 0.0
        %961 = vmatprep.subr.mxu0 0.0
        %962 = vmatpush1.xpose.msra.mxu0 0.0
        %963 = vmatprep.subr.mxu0 0.0
        %964 = vmatpush1.xpose.msra.mxu0 0.0
        %965 = vmatprep.subr.mxu0 0.0
        %966 = vmatpush1.xpose.msra.mxu0 0.0
        %967 = vmatprep.subr.mxu0 0.0
        %968 = vmatpush1.xpose.msra.mxu0 0.0
        %969 = vmatprep.subr.mxu0 0.0
        %970 = vmatpush1.xpose.msra.mxu0 0.0
        %971 = vmatprep.subr.mxu0 0.0
        %972 = vmatpush1.xpose.msra.mxu0 0.0
        %973 = vmatprep.subr.mxu0 0.0
        %974 = vmatpush1.xpose.msra.mxu0 0.0
        %975 = vmatprep.subr.mxu0 0.0
        %976 = vmatpush1.xpose.msra.mxu0 0.0
        %977 = vmatprep.subr.mxu0 0.0
        %978 = vmatpush1.xpose.msra.mxu0 0.0
        %979 = vmatprep.subr.mxu0 0.0
        %980 = vmatpush1.xpose.msra.mxu0 0.0
        %981 = vmatprep.subr.mxu0 0.0
        %982 = vmatpush1.xpose.msra.mxu0 0.0
        %983 = vmatprep.subr.mxu0 0.0
        %984 = vmatpush1.xpose.msra.mxu0 0.0
        %985 = vmatprep.subr.mxu0 0.0
        %986 = vmatpush1.xpose.msra.mxu0 0.0
        %987 = vmatprep.subr.mxu0 0.0
        %988 = vmatpush1.xpose.msra.mxu0 0.0
        %989 = vmatprep.subr.mxu0 0.0
        %990 = vmatpush1.xpose.msra.mxu0 0.0
        %991 = vmatprep.subr.mxu0 0.0
        %992 = vmatpush1.xpose.msra.mxu0 0.0
        %993 = vmatprep.subr.mxu0 0.0
        %994 = vmatpush1.xpose.msra.mxu0 0.0
        %995 = vmatprep.subr.mxu0 0.0
        %996 = vmatpush1.xpose.msra.mxu0 0.0
        %997 = vmatprep.subr.mxu0 0.0
        %998 = vmatpush1.xpose.msra.mxu0 0.0
        %999 = vmatprep.subr.mxu0 0.0
        %1000 = vmatpush1.xpose.msra.mxu0 0.0
        %1001 = vmatprep.subr.mxu0 0.0
        %1002 = vmatpush1.xpose.msra.mxu0 0.0
        %1003 = vmatprep.subr.mxu0 0.0
        %1004 = vmatpush1.xpose.msra.mxu0 0.0
        %1005 = vmatprep.subr.mxu0 0.0
        %1006 = vmatpush1.xpose.msra.mxu0 0.0
        %1007 = vmatprep.subr.mxu0 0.0
        %1008 = vmatpush1.xpose.msra.mxu0 0.0
        %1009 = vmatprep.subr.mxu0 0.0
        %1010 = vmatpush1.xpose.msra.mxu0 0.0
        %1011 = vmatprep.mubr.f32.mxu0 0.0
        %1012 = vmatmul.mubr.f32.gmra.mrb[0].mxu0 %v943
        %v1013 = vpop.f32.mrb[0].mxu0
        %v1014 = vadd.f32 %v611, %v1013
        %v1015 = vpop.f32.mrb[0].mxu0
        %1016 = vdwg.mxu0
        %v1017 = vsel %vm612, %v1014, -inf
        %1018 = vmax.xlane.f32.xlu0 %v1017
        %v1019 = vpop.xlane.xlu0 %1018
        %v1020 = vsub.f32 %v1014, %v1019
        %v1021 = vmul.f32 %v1020, 1.442695
        %v1022 = vpow.pop %v1021
        %v1023 = vsel %vm612, %v1022, 0.0
        %1024 = vadd.xlane.f32.xlu0 %v1023
        %v1025 = vpop.xlane.xlu0 %1024
        %v1026 = vrcp.pop %v1025
        %v1027 = vmul.f32 %v1022, %v1026
        %1028 = vrot.lane.b32.xlu0 %v603, 112
        %v1029 = vpop.permute.xlu0 %1028
        %v1032 = vsel %vm612, %v1027, 0
        %1034 = vmatprep.subr.mxu0 0.0
        %1035 = vmatpush1.msra.mxu0 %v1029
        %1036 = vmatprep.subr.mxu0 0.0
        %1037 = vmatpush1.msra.mxu0 0.0
        %1038 = vmatprep.subr.mxu0 0.0
        %1039 = vmatpush1.msra.mxu0 0.0
        %1040 = vmatprep.subr.mxu0 0.0
        %1041 = vmatpush1.msra.mxu0 0.0
        %1042 = vmatprep.subr.mxu0 0.0
        %1043 = vmatpush1.msra.mxu0 0.0
        %1044 = vmatprep.subr.mxu0 0.0
        %1045 = vmatpush1.msra.mxu0 0.0
        %1046 = vmatprep.subr.mxu0 0.0
        %1047 = vmatpush1.msra.mxu0 0.0
        %1048 = vmatprep.subr.mxu0 0.0
        %1049 = vmatpush1.msra.mxu0 0.0
        %1050 = vmatprep.subr.mxu0 0.0
        %1051 = vmatpush1.msra.mxu0 0.0
        %1052 = vmatprep.subr.mxu0 0.0
        %1053 = vmatpush1.msra.mxu0 0.0
        %1054 = vmatprep.subr.mxu0 0.0
        %1055 = vmatpush1.msra.mxu0 0.0
        %1056 = vmatprep.subr.mxu0 0.0
        %1057 = vmatpush1.msra.mxu0 0.0
        %1058 = vmatprep.subr.mxu0 0.0
        %1059 = vmatpush1.msra.mxu0 0.0
        %1060 = vmatprep.subr.mxu0 0.0
        %1061 = vmatpush1.msra.mxu0 0.0
        %1062 = vmatprep.subr.mxu0 0.0
        %1063 = vmatpush1.msra.mxu0 0.0
        %1064 = vmatprep.subr.mxu0 0.0
        %1065 = vmatpush1.msra.mxu0 0.0
        %1066 = vmatprep.subr.mxu0 0.0
        %1067 = vmatpush1.msra.mxu0 0.0
        %1068 = vmatprep.subr.mxu0 0.0
        %1069 = vmatpush1.msra.mxu0 0.0
        %1070 = vmatprep.subr.mxu0 0.0
        %1071 = vmatpush1.msra.mxu0 0.0
        %1072 = vmatprep.subr.mxu0 0.0
        %1073 = vmatpush1.msra.mxu0 0.0
        %1074 = vmatprep.subr.mxu0 0.0
        %1075 = vmatpush1.msra.mxu0 0.0
        %1076 = vmatprep.subr.mxu0 0.0
        %1077 = vmatpush1.msra.mxu0 0.0
        %1078 = vmatprep.subr.mxu0 0.0
        %1079 = vmatpush1.msra.mxu0 0.0
        %1080 = vmatprep.subr.mxu0 0.0
        %1081 = vmatpush1.msra.mxu0 0.0
        %1082 = vmatprep.subr.mxu0 0.0
        %1083 = vmatpush1.msra.mxu0 0.0
        %1084 = vmatprep.subr.mxu0 0.0
        %1085 = vmatpush1.msra.mxu0 0.0
        %1086 = vmatprep.subr.mxu0 0.0
        %1087 = vmatpush1.msra.mxu0 0.0
        %1088 = vmatprep.subr.mxu0 0.0
        %1089 = vmatpush1.msra.mxu0 0.0
        %1090 = vmatprep.subr.mxu0 0.0
        %1091 = vmatpush1.msra.mxu0 0.0
        %1092 = vmatprep.subr.mxu0 0.0
        %1093 = vmatpush1.msra.mxu0 0.0
        %1094 = vmatprep.subr.mxu0 0.0
        %1095 = vmatpush1.msra.mxu0 0.0
        %1096 = vmatprep.subr.mxu0 0.0
        %1097 = vmatpush1.msra.mxu0 0.0
        %1098 = vmatprep.mubr.f32.mxu0 0.0
        %1099 = vmatmul.mubr.f32.gmra.mrb[0].mxu0 %v1032
        %v1100 = vpop.f32.mrb[0].mxu0
        %v1101 = vadd.f32 0.0, %v1100
        %v1102 = vpop.f32.mrb[0].mxu0
        %1103 = vdwg.mxu0
        %1104 = vrot.lane.b32.xlu0 %v449, 104
        %v1105 = vpop.permute.xlu0 %1104
        %1106 = vrot.lane.b32.xlu0 %v526, 104
        %v1107 = vpop.permute.xlu0 %1106
        %v1108 = vsel %vm612, %v1105, 0
        %v1110 = vsel %vm612, %v1107, 0
        %1112 = vmatprep.subr.mxu0 0.0
        %1113 = vmatpush1.xpose.msra.mxu0 %v1110
        %1114 = vmatprep.subr.mxu0 0.0
        %1115 = vmatpush1.xpose.msra.mxu0 0.0
        %1116 = vmatprep.subr.mxu0 0.0
        %1117 = vmatpush1.xpose.msra.mxu0 0.0
        %1118 = vmatprep.subr.mxu0 0.0
        %1119 = vmatpush1.xpose.msra.mxu0 0.0
        %1120 = vmatprep.subr.mxu0 0.0
        %1121 = vmatpush1.xpose.msra.mxu0 0.0
        %1122 = vmatprep.subr.mxu0 0.0
        %1123 = vmatpush1.xpose.msra.mxu0 0.0
        %1124 = vmatprep.subr.mxu0 0.0
        %1125 = vmatpush1.xpose.msra.mxu0 0.0
        %1126 = vmatprep.subr.mxu0 0.0
        %1127 = vmatpush1.xpose.msra.mxu0 0.0
        %1128 = vmatprep.subr.mxu0 0.0
        %1129 = vmatpush1.xpose.msra.mxu0 0.0
        %1130 = vmatprep.subr.mxu0 0.0
        %1131 = vmatpush1.xpose.msra.mxu0 0.0
        %1132 = vmatprep.subr.mxu0 0.0
        %1133 = vmatpush1.xpose.msra.mxu0 0.0
        %1134 = vmatprep.subr.mxu0 0.0
        %1135 = vmatpush1.xpose.msra.mxu0 0.0
        %1136 = vmatprep.subr.mxu0 0.0
        %1137 = vmatpush1.xpose.msra.mxu0 0.0
        %1138 = vmatprep.subr.mxu0 0.0
        %1139 = vmatpush1.xpose.msra.mxu0 0.0
        %1140 = vmatprep.subr.mxu0 0.0
        %1141 = vmatpush1.xpose.msra.mxu0 0.0
        %1142 = vmatprep.subr.mxu0 0.0
        %1143 = vmatpush1.xpose.msra.mxu0 0.0
        %1144 = vmatprep.subr.mxu0 0.0
        %1145 = vmatpush1.xpose.msra.mxu0 0.0
        %1146 = vmatprep.subr.mxu0 0.0
        %1147 = vmatpush1.xpose.msra.mxu0 0.0
        %1148 = vmatprep.subr.mxu0 0.0
        %1149 = vmatpush1.xpose.msra.mxu0 0.0
        %1150 = vmatprep.subr.mxu0 0.0
        %1151 = vmatpush1.xpose.msra.mxu0 0.0
        %1152 = vmatprep.subr.mxu0 0.0
        %1153 = vmatpush1.xpose.msra.mxu0 0.0
        %1154 = vmatprep.subr.mxu0 0.0
        %1155 = vmatpush1.xpose.msra.mxu0 0.0
        %1156 = vmatprep.subr.mxu0 0.0
        %1157 = vmatpush1.xpose.msra.mxu0 0.0
        %1158 = vmatprep.subr.mxu0 0.0
        %1159 = vmatpush1.xpose.msra.mxu0 0.0
        %1160 = vmatprep.subr.mxu0 0.0
        %1161 = vmatpush1.xpose.msra.mxu0 0.0
        %1162 = vmatprep.subr.mxu0 0.0
        %1163 = vmatpush1.xpose.msra.mxu0 0.0
        %1164 = vmatprep.subr.mxu0 0.0
        %1165 = vmatpush1.xpose.msra.mxu0 0.0
        %1166 = vmatprep.subr.mxu0 0.0
        %1167 = vmatpush1.xpose.msra.mxu0 0.0
        %1168 = vmatprep.subr.mxu0 0.0
        %1169 = vmatpush1.xpose.msra.mxu0 0.0
        %1170 = vmatprep.subr.mxu0 0.0
        %1171 = vmatpush1.xpose.msra.mxu0 0.0
        %1172 = vmatprep.subr.mxu0 0.0
        %1173 = vmatpush1.xpose.msra.mxu0 0.0
        %1174 = vmatprep.subr.mxu0 0.0
        %1175 = vmatpush1.xpose.msra.mxu0 0.0
        %1176 = vmatprep.mubr.f32.mxu0 0.0
        %1177 = vmatmul.mubr.f32.gmra.mrb[0].mxu0 %v1108
        %v1178 = vpop.f32.mrb[0].mxu0
        %v1179 = vadd.f32 %v611, %v1178
        %v1180 = vpop.f32.mrb[0].mxu0
        %1181 = vdwg.mxu0
        %v1182 = vsel %vm612, %v1179, -inf
        %1183 = vmax.xlane.f32.xlu0 %v1182
        %v1184 = vpop.xlane.xlu0 %1183
        %v1185 = vsub.f32 %v1179, %v1184
        %v1186 = vmul.f32 %v1185, 1.442695
        %v1187 = vpow.pop %v1186
        %v1188 = vsel %vm612, %v1187, 0.0
        %1189 = vadd.xlane.f32.xlu0 %v1188
        %v1190 = vpop.xlane.xlu0 %1189
        %v1191 = vrcp.pop %v1190
        %v1192 = vmul.f32 %v1187, %v1191
        %1193 = vrot.lane.b32.xlu0 %v603, 104
        %v1194 = vpop.permute.xlu0 %1193
        %v1197 = vsel %vm612, %v1192, 0
        %1199 = vmatprep.subr.mxu0 0.0
        %1200 = vmatpush1.msra.mxu0 %v1194
        %1201 = vmatprep.subr.mxu0 0.0
        %1202 = vmatpush1.msra.mxu0 0.0
        %1203 = vmatprep.subr.mxu0 0.0
        %1204 = vmatpush1.msra.mxu0 0.0
        %1205 = vmatprep.subr.mxu0 0.0
        %1206 = vmatpush1.msra.mxu0 0.0
        %1207 = vmatprep.subr.mxu0 0.0
        %1208 = vmatpush1.msra.mxu0 0.0
        %1209 = vmatprep.subr.mxu0 0.0
        %1210 = vmatpush1.msra.mxu0 0.0
        %1211 = vmatprep.subr.mxu0 0.0
        %1212 = vmatpush1.msra.mxu0 0.0
        %1213 = vmatprep.subr.mxu0 0.0
        %1214 = vmatpush1.msra.mxu0 0.0
        %1215 = vmatprep.subr.mxu0 0.0
        %1216 = vmatpush1.msra.mxu0 0.0
        %1217 = vmatprep.subr.mxu0 0.0
        %1218 = vmatpush1.msra.mxu0 0.0
        %1219 = vmatprep.subr.mxu0 0.0
        %1220 = vmatpush1.msra.mxu0 0.0
        %1221 = vmatprep.subr.mxu0 0.0
        %1222 = vmatpush1.msra.mxu0 0.0
        %1223 = vmatprep.subr.mxu0 0.0
        %1224 = vmatpush1.msra.mxu0 0.0
        %1225 = vmatprep.subr.mxu0 0.0
        %1226 = vmatpush1.msra.mxu0 0.0
        %1227 = vmatprep.subr.mxu0 0.0
        %1228 = vmatpush1.msra.mxu0 0.0
        %1229 = vmatprep.subr.mxu0 0.0
        %1230 = vmatpush1.msra.mxu0 0.0
        %1231 = vmatprep.subr.mxu0 0.0
        %1232 = vmatpush1.msra.mxu0 0.0
        %1233 = vmatprep.subr.mxu0 0.0
        %1234 = vmatpush1.msra.mxu0 0.0
        %1235 = vmatprep.subr.mxu0 0.0
        %1236 = vmatpush1.msra.mxu0 0.0
        %1237 = vmatprep.subr.mxu0 0.0
        %1238 = vmatpush1.msra.mxu0 0.0
        %1239 = vmatprep.subr.mxu0 0.0
        %1240 = vmatpush1.msra.mxu0 0.0
        %1241 = vmatprep.subr.mxu0 0.0
        %1242 = vmatpush1.msra.mxu0 0.0
        %1243 = vmatprep.subr.mxu0 0.0
        %1244 = vmatpush1.msra.mxu0 0.0
        %1245 = vmatprep.subr.mxu0 0.0
        %1246 = vmatpush1.msra.mxu0 0.0
        %1247 = vmatprep.subr.mxu0 0.0
        %1248 = vmatpush1.msra.mxu0 0.0
        %1249 = vmatprep.subr.mxu0 0.0
        %1250 = vmatpush1.msra.mxu0 0.0
        %1251 = vmatprep.subr.mxu0 0.0
        %1252 = vmatpush1.msra.mxu0 0.0
        %1253 = vmatprep.subr.mxu0 0.0
        %1254 = vmatpush1.msra.mxu0 0.0
        %1255 = vmatprep.subr.mxu0 0.0
        %1256 = vmatpush1.msra.mxu0 0.0
        %1257 = vmatprep.subr.mxu0 0.0
        %1258 = vmatpush1.msra.mxu0 0.0
        %1259 = vmatprep.subr.mxu0 0.0
        %1260 = vmatpush1.msra.mxu0 0.0
        %1261 = vmatprep.subr.mxu0 0.0
        %1262 = vmatpush1.msra.mxu0 0.0
        %1263 = vmatprep.mubr.f32.mxu0 0.0
        %1264 = vmatmul.mubr.f32.gmra.mrb[0].mxu0 %v1197
        %v1265 = vpop.f32.mrb[0].mxu0
        %v1266 = vadd.f32 0.0, %v1265
        %v1267 = vpop.f32.mrb[0].mxu0
        %1268 = vdwg.mxu0
        %1270 = vrot.lane.b32.xlu0 %v936, 8
        %v1271 = vpop.permute.xlu0 %1270
        %1274 = vrot.lane.b32.xlu0 %v1101, 16
        %v1275 = vpop.permute.xlu0 %1274
        %1278 = vrot.lane.b32.xlu0 %v1266, 24
        %v1279 = vpop.permute.xlu0 %1278
        %v1281 = vsel %vm612, %v770, %v1271
        %vm1282 = vcmask 130048
        %v1283 = vsel %vm1282, %v1281, %v1275
        %vm1284 = vcmask 195584
        %v1285 = vsel %vm1284, %v1283, %v1279
        %v1286 = vlaneseq
        %v1287 = vshrl.u32 %v1286, 7
        %v1288 = vsub.s32 3, %v1287
        %v1289 = vrot.slane %v343, %v1288
        %v1291 = vsel %vm378, %v1285, 0
        %1293 = vmatprep.subr.mxu0 0.0
        %1294 = vmatpush1.msra.mxu0 %v360
        %1295 = vmatprep.subr.mxu0 0.0
        %1296 = vmatpush1.msra.mxu0 %v361
        %1297 = vmatprep.subr.mxu0 0.0
        %1298 = vmatpush1.msra.mxu0 %v362
        %1299 = vmatprep.subr.mxu0 0.0
        %1300 = vmatpush1.msra.mxu0 %v363
        %1301 = vmatprep.subr.mxu0 0.0
        %1302 = vmatpush1.msra.mxu0 0.0
        %1303 = vmatprep.subr.mxu0 0.0
        %1304 = vmatpush1.msra.mxu0 0.0
        %1305 = vmatprep.subr.mxu0 0.0
        %1306 = vmatpush1.msra.mxu0 0.0
        %1307 = vmatprep.subr.mxu0 0.0
        %1308 = vmatpush1.msra.mxu0 0.0
        %1309 = vmatprep.subr.mxu0 0.0
        %1310 = vmatpush1.msra.mxu0 0.0
        %1311 = vmatprep.subr.mxu0 0.0
        %1312 = vmatpush1.msra.mxu0 0.0
        %1313 = vmatprep.subr.mxu0 0.0
        %1314 = vmatpush1.msra.mxu0 0.0
        %1315 = vmatprep.subr.mxu0 0.0
        %1316 = vmatpush1.msra.mxu0 0.0
        %1317 = vmatprep.subr.mxu0 0.0
        %1318 = vmatpush1.msra.mxu0 0.0
        %1319 = vmatprep.subr.mxu0 0.0
        %1320 = vmatpush1.msra.mxu0 0.0
        %1321 = vmatprep.subr.mxu0 0.0
        %1322 = vmatpush1.msra.mxu0 0.0
        %1323 = vmatprep.subr.mxu0 0.0
        %1324 = vmatpush1.msra.mxu0 0.0
        %1325 = vmatprep.subr.mxu0 0.0
        %1326 = vmatpush1.msra.mxu0 0.0
        %1327 = vmatprep.subr.mxu0 0.0
        %1328 = vmatpush1.msra.mxu0 0.0
        %1329 = vmatprep.subr.mxu0 0.0
        %1330 = vmatpush1.msra.mxu0 0.0
        %1331 = vmatprep.subr.mxu0 0.0
        %1332 = vmatpush1.msra.mxu0 0.0
        %1333 = vmatprep.subr.mxu0 0.0
        %1334 = vmatpush1.msra.mxu0 0.0
        %1335 = vmatprep.subr.mxu0 0.0
        %1336 = vmatpush1.msra.mxu0 0.0
        %1337 = vmatprep.subr.mxu0 0.0
        %1338 = vmatpush1.msra.mxu0 0.0
        %1339 = vmatprep.subr.mxu0 0.0
        %1340 = vmatpush1.msra.mxu0 0.0
        %1341 = vmatprep.subr.mxu0 0.0
        %1342 = vmatpush1.msra.mxu0 0.0
        %1343 = vmatprep.subr.mxu0 0.0
        %1344 = vmatpush1.msra.mxu0 0.0
        %1345 = vmatprep.subr.mxu0 0.0
        %1346 = vmatpush1.msra.mxu0 0.0
        %1347 = vmatprep.subr.mxu0 0.0
        %1348 = vmatpush1.msra.mxu0 0.0
        %1349 = vmatprep.subr.mxu0 0.0
        %1350 = vmatpush1.msra.mxu0 0.0
        %1351 = vmatprep.subr.mxu0 0.0
        %1352 = vmatpush1.msra.mxu0 0.0
        %1353 = vmatprep.subr.mxu0 0.0
        %1354 = vmatpush1.msra.mxu0 0.0
        %1355 = vmatprep.subr.mxu0 0.0
        %1356 = vmatpush1.msra.mxu0 0.0
        %1357 = vmatprep.mubr.f32.mxu0 0.0
        %1358 = vmatmul.mubr.f32.gmra.mrb[0].mxu0 %v1291
        %v1359 = vpop.f32.mrb[0].mxu0
        %v1360 = vadd.f32 %v1289, %v1359
        %v1361 = vpop.f32.mrb[0].mxu0
        %1362 = vdwg.mxu0
        %v1363 = vadd.f32 %v340, %v1360
        %v1364 = vsel %vm378, %v1363, 0.0
        %1365 = vadd.xlane.f32.xlu0 %v1364
        %v1366 = vpop.xlane.xlu0 %1365
        %v1367 = vrcp.pop 32.0
        %v1368 = vmul.f32 %v1366, %v1367
        %v1369 = vsub.f32 %v1363, %v1368
        %v1370 = vmul.f32 %v1369, %v1369
        %v1371 = vsel %vm378, %v1370, 0.0
        %1372 = vadd.xlane.f32.xlu0 %v1371
        %v1373 = vpop.xlane.xlu0 %1372
        %v1374 = vmul.f32 %v1373, %v1367
        %v1375 = vadd.f32 %v1374, 1e-05
        %v1376 = vrsqrt.pop %v1375
        %v1377 = vmul.f32 %v1369, %v1376
        %v1378 = vlaneseq
        %v1379 = vshrl.u32 %v1378, 7
        %v1380 = vsub.s32 6, %v1379
        %v1381 = vrot.slane %v343, %v1380
        %v1382 = vmul.f32 %v1377, %v1381
        %v1383 = vlaneseq
        %v1384 = vshrl.u32 %v1383, 7
        %v1385 = vsub.s32 7, %v1384
        %v1386 = vrot.slane %v343, %v1385
        %v1387 = vadd.f32 %v1382, %v1386
        %v1388 = vlaneseq
        %v1389 = vshrl.u32 %v1388, 7
        %v1390 = vsub.s32 4, %v1389
        %v1391 = vrot.slane %v343, %v1390
        %v1393 = vsel %vm378, %v1387, 0
        %1395 = vmatprep.subr.mxu0 0.0
        %1396 = vmatpush1.msra.mxu0 %v365
        %1397 = vmatprep.subr.mxu0 0.0
        %1398 = vmatpush1.msra.mxu0 %v366
        %1399 = vmatprep.subr.mxu0 0.0
        %1400 = vmatpush1.msra.mxu0 %v367
        %1401 = vmatprep.subr.mxu0 0.0
        %1402 = vmatpush1.msra.mxu0 %v368
        %1403 = vmatprep.subr.mxu0 0.0
        %1404 = vmatpush1.msra.mxu0 0.0
        %1405 = vmatprep.subr.mxu0 0.0
        %1406 = vmatpush1.msra.mxu0 0.0
        %1407 = vmatprep.subr.mxu0 0.0
        %1408 = vmatpush1.msra.mxu0 0.0
        %1409 = vmatprep.subr.mxu0 0.0
        %1410 = vmatpush1.msra.mxu0 0.0
        %1411 = vmatprep.subr.mxu0 0.0
        %1412 = vmatpush1.msra.mxu0 0.0
        %1413 = vmatprep.subr.mxu0 0.0
        %1414 = vmatpush1.msra.mxu0 0.0
        %1415 = vmatprep.subr.mxu0 0.0
        %1416 = vmatpush1.msra.mxu0 0.0
        %1417 = vmatprep.subr.mxu0 0.0
        %1418 = vmatpush1.msra.mxu0 0.0
        %1419 = vmatprep.subr.mxu0 0.0
        %1420 = vmatpush1.msra.mxu0 0.0
        %1421 = vmatprep.subr.mxu0 0.0
        %1422 = vmatpush1.msra.mxu0 0.0
        %1423 = vmatprep.subr.mxu0 0.0
        %1424 = vmatpush1.msra.mxu0 0.0
        %1425 = vmatprep.subr.mxu0 0.0
        %1426 = vmatpush1.msra.mxu0 0.0
        %1427 = vmatprep.subr.mxu0 0.0
        %1428 = vmatpush1.msra.mxu0 0.0
        %1429 = vmatprep.subr.mxu0 0.0
        %1430 = vmatpush1.msra.mxu0 0.0
        %1431 = vmatprep.subr.mxu0 0.0
        %1432 = vmatpush1.msra.mxu0 0.0
        %1433 = vmatprep.subr.mxu0 0.0
        %1434 = vmatpush1.msra.mxu0 0.0
        %1435 = vmatprep.subr.mxu0 0.0
        %1436 = vmatpush1.msra.mxu0 0.0
        %1437 = vmatprep.subr.mxu0 0.0
        %1438 = vmatpush1.msra.mxu0 0.0
        %1439 = vmatprep.subr.mxu0 0.0
        %1440 = vmatpush1.msra.mxu0 0.0
        %1441 = vmatprep.subr.mxu0 0.0
        %1442 = vmatpush1.msra.mxu0 0.0
        %1443 = vmatprep.subr.mxu0 0.0
        %1444 = vmatpush1.msra.mxu0 0.0
        %1445 = vmatprep.subr.mxu0 0.0
        %1446 = vmatpush1.msra.mxu0 0.0
        %1447 = vmatprep.subr.mxu0 0.0
        %1448 = vmatpush1.msra.mxu0 0.0
        %1449 = vmatprep.subr.mxu0 0.0
        %1450 = vmatpush1.msra.mxu0 0.0
        %1451 = vmatprep.subr.mxu0 0.0
        %1452 = vmatpush1.msra.mxu0 0.0
        %1453 = vmatprep.subr.mxu0 0.0
        %1454 = vmatpush1.msra.mxu0 0.0
        %1455 = vmatprep.subr.mxu0 0.0
        %1456 = vmatpush1.msra.mxu0 0.0
        %1457 = vmatprep.subr.mxu0 0.0
        %1458 = vmatpush1.msra.mxu0 0.0
        %1459 = vmatprep.mubr.f32.mxu0 0.0
        %1460 = vmatmul.mubr.f32.gmra.mrb[0].mxu0 %v1393
        %v1461 = vpop.f32.mrb[0].mxu0
        %v1462 = vadd.f32 %v1391, %v1461
        %v1463 = vpop.f32.mrb[0].mxu0
        %1464 = vdwg.mxu0
        %v1465 = vmax.f32 %v1462, 0.0
        %v1466 = vlaneseq
        %v1467 = vshrl.u32 %v1466, 7
        %v1468 = vsub.s32 5, %v1467
        %v1469 = vrot.slane %v343, %v1468
        %v1471 = vsel %vm378, %v1465, 0
        %1473 = vmatprep.subr.mxu0 0.0
        %1474 = vmatpush1.msra.mxu0 %v370
        %1475 = vmatprep.subr.mxu0 0.0
        %1476 = vmatpush1.msra.mxu0 %v371
        %1477 = vmatprep.subr.mxu0 0.0
        %1478 = vmatpush1.msra.mxu0 %v372
        %1479 = vmatprep.subr.mxu0 0.0
        %1480 = vmatpush1.msra.mxu0 %v373
        %1481 = vmatprep.subr.mxu0 0.0
        %1482 = vmatpush1.msra.mxu0 0.0
        %1483 = vmatprep.subr.mxu0 0.0
        %1484 = vmatpush1.msra.mxu0 0.0
        %1485 = vmatprep.subr.mxu0 0.0
        %1486 = vmatpush1.msra.mxu0 0.0
        %1487 = vmatprep.subr.mxu0 0.0
        %1488 = vmatpush1.msra.mxu0 0.0
        %1489 = vmatprep.subr.mxu0 0.0
        %1490 = vmatpush1.msra.mxu0 0.0
        %1491 = vmatprep.subr.mxu0 0.0
        %1492 = vmatpush1.msra.mxu0 0.0
        %1493 = vmatprep.subr.mxu0 0.0
        %1494 = vmatpush1.msra.mxu0 0.0
        %1495 = vmatprep.subr.mxu0 0.0
        %1496 = vmatpush1.msra.mxu0 0.0
        %1497 = vmatprep.subr.mxu0 0.0
        %1498 = vmatpush1.msra.mxu0 0.0
        %1499 = vmatprep.subr.mxu0 0.0
        %1500 = vmatpush1.msra.mxu0 0.0
        %1501 = vmatprep.subr.mxu0 0.0
        %1502 = vmatpush1.msra.mxu0 0.0
        %1503 = vmatprep.subr.mxu0 0.0
        %1504 = vmatpush1.msra.mxu0 0.0
        %1505 = vmatprep.subr.mxu0 0.0
        %1506 = vmatpush1.msra.mxu0 0.0
        %1507 = vmatprep.subr.mxu0 0.0
        %1508 = vmatpush1.msra.mxu0 0.0
        %1509 = vmatprep.subr.mxu0 0.0
        %1510 = vmatpush1.msra.mxu0 0.0
        %1511 = vmatprep.subr.mxu0 0.0
        %1512 = vmatpush1.msra.mxu0 0.0
        %1513 = vmatprep.subr.mxu0 0.0
        %1514 = vmatpush1.msra.mxu0 0.0
        %1515 = vmatprep.subr.mxu0 0.0
        %1516 = vmatpush1.msra.mxu0 0.0
        %1517 = vmatprep.subr.mxu0 0.0
        %1518 = vmatpush1.msra.mxu0 0.0
        %1519 = vmatprep.subr.mxu0 0.0
        %1520 = vmatpush1.msra.mxu0 0.0
        %1521 = vmatprep.subr.mxu0 0.0
        %1522 = vmatpush1.msra.mxu0 0.0
        %1523 = vmatprep.subr.mxu0 0.0
        %1524 = vmatpush1.msra.mxu0 0.0
        %1525 = vmatprep.subr.mxu0 0.0
        %1526 = vmatpush1.msra.mxu0 0.0
        %1527 = vmatprep.subr.mxu0 0.0
        %1528 = vmatpush1.msra.mxu0 0.0
        %1529 = vmatprep.subr.mxu0 0.0
        %1530 = vmatpush1.msra.mxu0 0.0
        %1531 = vmatprep.subr.mxu0 0.0
        %1532 = vmatpush1.msra.mxu0 0.0
        %1533 = vmatprep.subr.mxu0 0.0
        %1534 = vmatpush1.msra.mxu0 0.0
        %1535 = vmatprep.subr.mxu0 0.0
        %1536 = vmatpush1.msra.mxu0 0.0
        %1537 = vmatprep.mubr.f32.mxu0 0.0
        %1538 = vmatmul.mubr.f32.gmra.mrb[0].mxu0 %v1471
        %v1539 = vpop.f32.mrb[0].mxu0
        %v1540 = vadd.f32 %v1469, %v1539
        %v1541 = vpop.f32.mrb[0].mxu0
        %1542 = vdwg.mxu0
        %v1543 = vadd.f32 %v1387, %v1540
        %v1544 = vsel %vm378, %v1543, 0.0
        %1545 = vadd.xlane.f32.xlu0 %v1544
        %v1546 = vpop.xlane.xlu0 %1545
        %v1547 = vmul.f32 %v1546, %v1367
        %v1548 = vsub.f32 %v1543, %v1547
        %v1549 = vmul.f32 %v1548, %v1548
        %v1550 = vsel %vm378, %v1549, 0.0
        %1551 = vadd.xlane.f32.xlu0 %v1550
        %v1552 = vpop.xlane.xlu0 %1551
        %v1553 = vmul.f32 %v1552, %v1367
        %v1554 = vadd.f32 %v1553, 1e-05
        %v1555 = vrsqrt.pop %v1554
        %v1556 = vmul.f32 %v1548, %v1555
        %v1557 = vlaneseq
        %v1558 = vshrl.u32 %v1557, 7
        %v1559 = vsub.s32 0, %v1558
        %v1560 = vrot.slane %v344, %v1559
        %v1561 = vmul.f32 %v1556, %v1560
        %v1562 = vlaneseq
        %v1563 = vshrl.u32 %v1562, 7
        %v1564 = vsub.s32 1, %v1563
        %v1565 = vrot.slane %v344, %v1564
        %v1566 = vadd.f32 %v1561, %v1565
        %1567 = vst.msk [vmem:[%s339] sm:$0xff] %vm378, %v1566
        %s1568 = sand.u32 %s154, 1
        %s1569 = scalar_lea.sflag [#allocation4], %s1568
        %s1570 = sand.u32 %s154, 1
        %s1571 = smul.addr %s1570, 8
        %s1572 = scalar_lea.vmem [#allocation11], %s1571
        // Predicated region
        $region61: #{blocks_forward.1} parent=39 // pred_check
          %p1573 = pneg %p164
        $region62: #{blocks_forward.1} parent=39 // pred_check_branch
          %1575 = sbr.rel (%p1573) target = $region64
        $region63: #{blocks_forward.1} parent=39 // pred_region
          %s1577 = ssub.s32 128, 128
          %1578 = vsyncadd %s1569, %s1577
          %s1579 = smul.addr %s26, 128
          %s1580 = scalar_lea.hbm %s5, %s1579
          %s1582 = sshll.u32 %s1572, 4
          %s1583 = int_to_ptr.vmem [resolvable:$true] %s1582
          %1585 = dma.vmem_to_hbm [thread:$0]  %s1583, 128, %s1580, %s1569
        $region64: #{blocks_forward.1} parent=39 // pred_fallthru
          _
      $region40: #{blocks_forward.1} parent=5 // pred_fallthru
        _
      %p1586 = scmp.le.s32.totalorder 2, %s21
      // Predicated region
      $region65: #{blocks_forward.1} parent=5 // pred_check
        %p1587 = pneg %p1586
      $region66: #{blocks_forward.1} parent=5 // pred_check_branch
        %1589 = sbr.rel (%p1587) target = $region68
      $region67: #{blocks_forward.1} parent=5 // pred_region
        %s1590 = ssub.s32 %s21, 2
        // Predicated region
        $region69: #{blocks_forward.1} parent=67 // pred_check
          %p1591 = pneg %p170
        $region70: #{blocks_forward.1} parent=67 // pred_check_branch
          %1593 = sbr.rel (%p1591) target = $region72
        $region71: #{blocks_forward.1} parent=67 // pred_region
          %s1594 = sand.u32 %s155, 1
          %s1595 = scalar_lea.sflag [#allocation4], %s1594
          %s1596 = sand.u32 %s155, 1
          %s1597 = smul.addr %s1596, 8
          %s1598 = scalar_lea.vmem [#allocation11], %s1597
          %1599 = dma.done %s1595, 128
        $region72: #{blocks_forward.1} parent=67 // pred_fallthru
          _
      $region68: #{blocks_forward.1} parent=5 // pred_fallthru
        _
    $region6: #{blocks_forward.1} parent=1 // loop_footer
      %s25 = sadd.s32 1, %s21
    $region7: #{blocks_forward.1} parent=1 // loop_footer_branch
      %20 = sbr.rel target = $region3
    $region8: #{blocks_forward.1} parent=1 // loop_exit
      _
    %1600 = vsyncpa [#allocation3], 1
    %s1601 = scalar_lea.sflag [#allocation3], 1
    %1602 = vsyncpa %s1601, 1
    %1603 = vsyncpa [#allocation6], 1
    %s1604 = scalar_lea.sflag [#allocation6], 1
    %1605 = vsyncpa %s1604, 1
    %1606 = vsyncpa [#allocation9], 1
    %1607 = vsyncpa [#allocation4], 1
    %s1608 = scalar_lea.sflag [#allocation4], 1
    %1609 = vsyncpa %s1608, 1

</llo_original>
